<compile_context>
chip_gen: v7x
topology: tpu7x:2x2x1
jax: 0.10.0
libtpu: 0.0.40
codegen_flags: <defaults>
</compile_context>

<pallas_src>
import math

import jax
import jax.numpy as jnp
from jax.experimental import pallas as pl
from jax.experimental.pallas import tpu as pltpu


# ----------------------------------------------------------------------------
# Pallas kernel: the FULL encoder stack for one batch block.
# Grid = (num_batch_blocks, num_layers); activation is resident in o_ref.
# ----------------------------------------------------------------------------
def make_encoder_kernel(Bblk, T, C, H, F, f_chunk, eps=1e-5):
    HD = C // H
    N = Bblk * T

    def layer_norm(x, g, b):
        # Single-statistics LayerNorm: var = E[x^2] - mu^2 (both reductions
        # read only x). Clamp to 0 against tiny negative round-off.
        mu = jnp.mean(x, axis=-1, keepdims=True)
        var = jnp.maximum(jnp.mean(x * x, axis=-1, keepdims=True) - mu * mu, 0.0)
        return (x - mu) * jax.lax.rsqrt(var + eps) * g + b

    def kernel(x_ref, mask_ref,
               wqkv_ref, bqkv_ref, wo_ref, bo_ref,
               g1_ref, be1_ref, w1_ref, bf1_ref, w2_ref, bf2_ref,
               g2_ref, be2_ref,
               o_ref, ctx_ref):
        # Layer 0: load the embedded input into the resident output block.
        @pl.when(pl.program_id(1) == 0)
        def _():
            o_ref[...] = x_ref[...]

        x = o_ref[...].reshape(N, C)          # f32 residual stream [N, C]

        # Hoisted mask broadcast: one broadcast per layer, not one per head.
        addmask_full = jnp.broadcast_to(mask_ref[...], (Bblk, T, T))

        # ---- fused QKV projection (single MXU pass over x) -----------------
        # bias added in f32, then ONE bf16 cast; q-scale folded in wrapper.
        qkv = jnp.dot(x.astype(jnp.bfloat16), wqkv_ref[0],
                      preferred_element_type=jnp.float32) + bqkv_ref[0]  # [N,3C] f32
        qkv = qkv.reshape(Bblk, T, 3 * C).astype(jnp.bfloat16)
        q = qkv[:, :, :C]
        k = qkv[:, :, C:2 * C]
        v = qkv[:, :, 2 * C:]

        # ---- multi-head attention: static head loop, batched over Bblk -----
        # Each head writes its context into the resident ctx scratch at lane
        # offset h*HD (no lane-axis concat, no all-heads-live temporaries).
        for h in range(H):
            sl = slice(h * HD, (h + 1) * HD)
            s = jnp.einsum('bqd,bkd->bqk', q[:, :, sl], k[:, :, sl],
                           preferred_element_type=jnp.float32)           # [Bblk,T,T]
            s = s + addmask_full                          # key-padding mask
            s = s - jnp.max(s, axis=-1, keepdims=True)
            e = jnp.exp(s)
            p = e * pl.reciprocal(jnp.sum(e, axis=-1, keepdims=True), approx=True)
            ctx_ref[:, :, sl] = jnp.einsum(
                'bqk,bkd->bqd', p.astype(jnp.bfloat16), v[:, :, sl],
                preferred_element_type=jnp.float32)                      # [Bblk,T,HD]

        ctx = ctx_ref[...].reshape(N, C).astype(jnp.bfloat16)
        attn = jnp.dot(ctx, wo_ref[0],
                       preferred_element_type=jnp.float32) + bo_ref[0]
        # ---- residual + LayerNorm 1 (post-norm) -----------------------------
        x = layer_norm(x + attn, g1_ref[0], be1_ref[0])

        # ---- feed-forward, chunked over F (never materializes f32 [N,F]) ----
        x_bf = x.astype(jnp.bfloat16)
        ff = jnp.zeros((N, C), jnp.float32)
        for f0 in range(0, F, f_chunk):
            f1 = min(f0 + f_chunk, F)
            h1 = jnp.dot(x_bf, w1_ref[0, :, f0:f1],
                         preferred_element_type=jnp.float32) + bf1_ref[0, :, f0:f1]
            h1 = jnp.maximum(h1, 0.0).astype(jnp.bfloat16)               # ReLU, bf16
            ff = ff + jnp.dot(h1, w2_ref[0, f0:f1, :],
                              preferred_element_type=jnp.float32)

        # ---- residual + LayerNorm 2 ------------------------------------------
        x = layer_norm(x + ff + bf2_ref[0], g2_ref[0], be2_ref[0])

        o_ref[...] = x.reshape(Bblk, T, C)

    return kernel


def run_encoder_stack(x, addmask, packed, *, batch_blocks=1):
    """x: [B, T, C] f32, addmask: [B, 1, T] f32.  Returns [B, T, C] f32.

    batch_blocks: number of blocks along the "parallel" batch grid axis.
      Keep 1 on single-TC chips (v5e/v6e) so weights stream exactly once;
      set 2 on v7x so both TensorCores are used.
    """
    B, T, C = x.shape
    L = packed["wqkv"].shape[0]
    H = packed["num_heads"]
    F = packed["w1"].shape[-1]

    nb = batch_blocks
    assert B % nb == 0, (B, nb)
    Bblk = B // nb
    f_chunk = min(512, F)                    # FFN chunk width (F-tile)
    kernel = make_encoder_kernel(Bblk, T, C, H, F, f_chunk)

    weight_names = ["wqkv", "bqkv", "wo", "bo", "g1", "be1",
                    "w1", "bf1", "w2", "bf2", "g2", "be2"]
    weights = [packed[n] for n in weight_names]

    def wspec(arr):                # [L, a, b] -> per-layer block, prefetched
        return pl.BlockSpec((1,) + arr.shape[1:], lambda b, l: (l, 0, 0))

    in_specs = [
        pl.BlockSpec((Bblk, T, C), lambda b, l: (b, 0, 0)),   # embedded input
        pl.BlockSpec((Bblk, 1, T), lambda b, l: (b, 0, 0)),   # key-pad mask
    ] + [wspec(w) for w in weights]

    # ---- explicit scoped-VMEM sizing (defaults are 16/32 MiB) ---------------
    N = Bblk * T
    per_layer_w = sum(
        math.prod(w.shape[1:]) * w.dtype.itemsize for w in weights)
    act = Bblk * T * C * 4
    tmp = (N * 3 * C * 4                 # qkv f32 before the single cast
           + N * 3 * C * 2               # qkv bf16
           + 2 * Bblk * T * T * 4        # one head's scores / probs
           + 2 * N * f_chunk * 4         # one FFN chunk (f32 + bf16)
           + 3 * N * C * 4)              # residual / ffn accumulators
    est = (2 * per_layer_w               # double-buffered streamed weights
           + 2 * (act + Bblk * T * 4)    # double-buffered x + mask blocks
           + 2 * act                     # resident output block (+ slack)
           + act                         # ctx scratch
           + tmp)
    vmem_limit = int(min(max(2 * est, 32 << 20), 96 << 20))

    return pl.pallas_call(
        kernel,
        out_shape=jax.ShapeDtypeStruct((B, T, C), jnp.float32),
        grid=(nb, L),
        in_specs=in_specs,
        # Constant block index across the layer axis -> activation stays
        # resident in VMEM across all layers, written to HBM once per b.
        out_specs=pl.BlockSpec((Bblk, T, C), lambda b, l: (b, 0, 0)),
        scratch_shapes=[pltpu.VMEM((Bblk, T, C), jnp.float32)],   # ctx scratch
        compiler_params=pltpu.CompilerParams(
            dimension_semantics=("parallel", "arbitrary"),
            vmem_limit_bytes=vmem_limit),
    )(x, addmask, *weights)


# ----------------------------------------------------------------------------
# Glue: fairseq-style embedding preparation (scale + sinusoidal positions).
# ----------------------------------------------------------------------------
def sinusoidal_pos_embedding(tokens, dim, pad):
    """fairseq SinusoidalPositionalEmbedding + utils.make_positions."""
    mask = (tokens != pad).astype(jnp.int32)
    positions = jnp.cumsum(mask, axis=1) * mask + pad            # [B, T]
    half = dim // 2
    inv_freq = jnp.exp(jnp.arange(half, dtype=jnp.float32)
                       * -(math.log(10000.0) / (half - 1)))
    ang = positions[..., None].astype(jnp.float32) * inv_freq[None, None, :]
    pe = jnp.concatenate([jnp.sin(ang), jnp.cos(ang)], axis=-1)  # [B, T, dim]
    pe = pe * mask[..., None].astype(jnp.float32)                # zero pad rows
    return pe


def embed_and_mask(ASR_output, prev_encoder, pad):
    B, T, C = ASR_output.shape
    pad_mask = (prev_encoder == pad)                             # [B, T] bool
    x = math.sqrt(C) * ASR_output + sinusoidal_pos_embedding(prev_encoder, C, pad)
    x = x * (1.0 - pad_mask[..., None].astype(x.dtype))
    return x.astype(jnp.float32), pad_mask


def transformer_adapter_forward(ASR_output, prev_encoder, packed, pad,
                                batch_blocks=1):
    """ASR_output: [B, T, C] f32 token embeddings; prev_encoder: [B, T] int32.
    Returns encoder_out in fairseq layout [T, B, C]."""
    x, pad_mask = embed_and_mask(ASR_output, prev_encoder, pad)
    addmask = jnp.where(pad_mask, -1e9, 0.0).astype(jnp.float32)[:, None, :]
    out = run_encoder_stack(x, addmask, packed, batch_blocks=batch_blocks)
    return jnp.transpose(out, (1, 0, 2))                         # [T, B, C]


# ----------------------------------------------------------------------------
# Parameters (mirrors copy_module -> init_bert_params: linear ~ N(0, 0.02),
# biases 0, LayerNorm gamma=1 beta=0).  Returns:
#   packed: layer-stacked, QKV-fused, q-scale-folded, bf16 matmul weights
#   raw   : per-layer f32 params for the pure-JAX reference
# ----------------------------------------------------------------------------
def init_params(key, num_layers, C, H, F):
    HD = C // H
    scaling = HD ** -0.5
    raw = []
    for _ in range(num_layers):
        keys = jax.random.split(key, 7)
        key = keys[0]
        raw.append({
            "num_heads": H,
            "wq": 0.02 * jax.random.normal(keys[1], (C, C), jnp.float32),
            "bq": jnp.zeros((1, C), jnp.float32),
            "wk": 0.02 * jax.random.normal(keys[2], (C, C), jnp.float32),
            "bk": jnp.zeros((1, C), jnp.float32),
            "wv": 0.02 * jax.random.normal(keys[3], (C, C), jnp.float32),
            "bv": jnp.zeros((1, C), jnp.float32),
            "wo": 0.02 * jax.random.normal(keys[4], (C, C), jnp.float32),
            "bo": jnp.zeros((1, C), jnp.float32),
            "g1": jnp.ones((1, C), jnp.float32),
            "be1": jnp.zeros((1, C), jnp.float32),
            "w1": 0.02 * jax.random.normal(keys[5], (C, F), jnp.float32),
            "bf1": jnp.zeros((1, F), jnp.float32),
            "w2": 0.02 * jax.random.normal(keys[6], (F, C), jnp.float32),
            "bf2": jnp.zeros((1, C), jnp.float32),
            "g2": jnp.ones((1, C), jnp.float32),
            "be2": jnp.zeros((1, C), jnp.float32),
        })

    def stack(fn):
        return jnp.stack([fn(lp) for lp in raw], axis=0)

    packed = {
        "num_heads": H,
        # fused QKV, q-scale folded into weight AND bias (fairseq scales q_proj output)
        "wqkv": stack(lambda lp: jnp.concatenate(
            [lp["wq"] * scaling, lp["wk"], lp["wv"]], axis=1)).astype(jnp.bfloat16),
        "bqkv": stack(lambda lp: jnp.concatenate(
            [lp["bq"] * scaling, lp["bk"], lp["bv"]], axis=1)),
        "wo": stack(lambda lp: lp["wo"]).astype(jnp.bfloat16),
        "bo": stack(lambda lp: lp["bo"]),
        "g1": stack(lambda lp: lp["g1"]),
        "be1": stack(lambda lp: lp["be1"]),
        "w1": stack(lambda lp: lp["w1"]).astype(jnp.bfloat16),
        "bf1": stack(lambda lp: lp["bf1"]),
        "w2": stack(lambda lp: lp["w2"]).astype(jnp.bfloat16),
        "bf2": stack(lambda lp: lp["bf2"]),
        "g2": stack(lambda lp: lp["g2"]),
        "be2": stack(lambda lp: lp["be2"]),
    }
    return packed, raw


# ----------------------------------------------------------------------------
# Pure-JAX f32 reference (fairseq post-norm encoder) for a numerical check.
# ----------------------------------------------------------------------------
def _layer_norm(x, g, b, eps=1e-5):
    mu = jnp.mean(x, axis=-1, keepdims=True)
    var = jnp.mean(jnp.square(x - mu), axis=-1, keepdims=True)
    return (x - mu) * jax.lax.rsqrt(var + eps) * g + b


def reference_forward(ASR_output, prev_encoder, raw_layers, pad):
    B, T, C = ASR_output.shape
    x, pad_mask = embed_and_mask(ASR_output, prev_encoder, pad)
    addmask = jnp.where(pad_mask, -1e9, 0.0)[:, None, None, :]   # [B,1,1,T]
    for lp in raw_layers:
        H = lp["num_heads"]
        HD = C // H
        q = (x @ lp["wq"] + lp["bq"]) * (HD ** -0.5)
        k = x @ lp["wk"] + lp["bk"]
        v = x @ lp["wv"] + lp["bv"]
        q = q.reshape(B, T, H, HD).transpose(0, 2, 1, 3)
        k = k.reshape(B, T, H, HD).transpose(0, 2, 1, 3)
        v = v.reshape(B, T, H, HD).transpose(0, 2, 1, 3)
        s = jnp.einsum('bhqd,bhkd->bhqk', q, k) + addmask
        p = jax.nn.softmax(s, axis=-1)
        ctx = jnp.einsum('bhqk,bhkd->bhqd', p, v)
        ctx = ctx.transpose(0, 2, 1, 3).reshape(B, T, C)
        x = x + (ctx @ lp["wo"] + lp["bo"])
        x = _layer_norm(x, lp["g1"], lp["be1"])
        h1 = jnp.maximum(x @ lp["w1"] + lp["bf1"], 0.0)
        x = x + (h1 @ lp["w2"] + lp["bf2"])
        x = _layer_norm(x, lp["g2"], lp["be2"])
    return jnp.transpose(x, (1, 0, 2))


if __name__ == "__main__":
    # Small shapes consistent with the module's forward:
    #   ASR_output / token_embeddings : [B, T, C]
    #   prev_encoder (token ids)      : [B, T]
    B, T, C, H, F, NUM_LAYERS, PAD = 2, 8, 32, 4, 64, 2, 1

    key = jax.random.PRNGKey(0)
    k_emb, k_par = jax.random.split(key)

    ASR_output = jax.random.normal(k_emb, (B, T, C), jnp.float32)
    prev_encoder = jnp.array(
        [[5, 7, 9, 11, 13, 15, 17, 19],          # no padding
         [5, 7, 9, 11, 13, PAD, PAD, PAD]],      # 3 padded positions
        dtype=jnp.int32)

    packed, raw_layers = init_params(k_par, NUM_LAYERS, C, H, F)

    # TODO(synk): forward_train glancing path (_mask with torch in-place uniform RNG,
    # decoder argmax) has no deterministic Pallas equivalent and is not implemented.
    out = transformer_adapter_forward(ASR_output, prev_encoder, packed, PAD,
                                      batch_blocks=1)
    out = jax.block_until_ready(out)

    assert out.shape == (T, B, C), out.shape
    assert bool(jnp.all(jnp.isfinite(out)))

    # Numerical check against a pure-JAX f32 reference (kernel uses bf16
    # matmul inputs + approx reciprocal -> loose tolerance).
    ref = reference_forward(ASR_output, prev_encoder, raw_layers, PAD)
    err = float(jnp.max(jnp.abs(out - ref)))
    assert err < 7.5e-2, f"max abs diff vs reference: {err}"

    print("KERNEL_OK")
</pallas_src>

<mosaic_0001>
module attributes {stable_mosaic.version = 11 : i64} {
  func.func @kernel(%arg0: i32, %arg1: i32, %arg2: memref<2x8x32xf32, #tpu.memory_space<vmem>>, %arg3: memref<2x1x8xf32, #tpu.memory_space<vmem>>, %arg4: memref<1x32x96xbf16, #tpu.memory_space<vmem>>, %arg5: memref<1x1x96xf32, #tpu.memory_space<vmem>>, %arg6: memref<1x32x32xbf16, #tpu.memory_space<vmem>>, %arg7: memref<1x1x32xf32, #tpu.memory_space<vmem>>, %arg8: memref<1x1x32xf32, #tpu.memory_space<vmem>>, %arg9: memref<1x1x32xf32, #tpu.memory_space<vmem>>, %arg10: memref<1x32x64xbf16, #tpu.memory_space<vmem>>, %arg11: memref<1x1x64xf32, #tpu.memory_space<vmem>>, %arg12: memref<1x64x32xbf16, #tpu.memory_space<vmem>>, %arg13: memref<1x1x32xf32, #tpu.memory_space<vmem>>, %arg14: memref<1x1x32xf32, #tpu.memory_space<vmem>>, %arg15: memref<1x1x32xf32, #tpu.memory_space<vmem>>, %arg16: memref<2x8x32xf32, #tpu.memory_space<vmem>>, %arg17: memref<2x8x32xf32, #tpu.memory_space<vmem>>) attributes {dimension_semantics = [#tpu.dimension_semantics<parallel>, #tpu.dimension_semantics<arbitrary>], iteration_bounds = array<i64: 1, 2>, scalar_prefetch = 0 : i64, scratch_operands = 1 : i64, tpu.core_type = #tpu.core_type<tc>, window_params = [{transform_indices = @transform_0, window_bounds = array<i64: 2, 8, 32>}, {transform_indices = @transform_1, window_bounds = array<i64: 2, 1, 8>}, {transform_indices = @transform_2, window_bounds = array<i64: 1, 32, 96>}, {transform_indices = @transform_3, window_bounds = array<i64: 1, 1, 96>}, {transform_indices = @transform_4, window_bounds = array<i64: 1, 32, 32>}, {transform_indices = @transform_5, window_bounds = array<i64: 1, 1, 32>}, {transform_indices = @transform_6, window_bounds = array<i64: 1, 1, 32>}, {transform_indices = @transform_7, window_bounds = array<i64: 1, 1, 32>}, {transform_indices = @transform_8, window_bounds = array<i64: 1, 32, 64>}, {transform_indices = @transform_9, window_bounds = array<i64: 1, 1, 64>}, {transform_indices = @transform_10, window_bounds = array<i64: 1, 64, 32>}, {transform_indices = @transform_11, window_bounds = array<i64: 1, 1, 32>}, {transform_indices = @transform_12, window_bounds = array<i64: 1, 1, 32>}, {transform_indices = @transform_13, window_bounds = array<i64: 1, 1, 32>}, {transform_indices = @transform_14, window_bounds = array<i64: 2, 8, 32>}]} {
    %c0_i32 = arith.constant 0 : i32
    %0 = arith.cmpi eq, %arg1, %c0_i32 : i32
    %1 = arith.extui %0 : i1 to i32
    %c0_i32_0 = arith.constant 0 : i32
    %2 = arith.cmpi ne, %1, %c0_i32_0 : i32
    scf.if %2 {
      %c0_90 = arith.constant 0 : index
      %c0_91 = arith.constant 0 : index
      %c0_92 = arith.constant 0 : index
      %183 = vector.load %arg2[%c0_90, %c0_91, %c0_92] : memref<2x8x32xf32, #tpu.memory_space<vmem>>, vector<2x8x32xf32>
      %c0_93 = arith.constant 0 : index
      %c0_94 = arith.constant 0 : index
      %c0_95 = arith.constant 0 : index
      %184 = vector.load %arg16[%c0_93, %c0_94, %c0_95] : memref<2x8x32xf32, #tpu.memory_space<vmem>>, vector<2x8x32xf32>
      tpu.vector_store %arg16[%c0_93, %c0_94, %c0_95], %183 {strides = array<i32>} : memref<2x8x32xf32, #tpu.memory_space<vmem>>, vector<2x8x32xf32>,
    } else {
    }
    %c0 = arith.constant 0 : index
    %c0_1 = arith.constant 0 : index
    %c0_2 = arith.constant 0 : index
    %3 = vector.load %arg16[%c0, %c0_1, %c0_2] : memref<2x8x32xf32, #tpu.memory_space<vmem>>, vector<2x8x32xf32>
    %4 = vector.shape_cast %3 : vector<2x8x32xf32> to vector<16x32xf32>
    %c0_3 = arith.constant 0 : index
    %c0_4 = arith.constant 0 : index
    %c0_5 = arith.constant 0 : index
    %5 = vector.load %arg3[%c0_3, %c0_4, %c0_5] : memref<2x1x8xf32, #tpu.memory_space<vmem>>, vector<2x1x8xf32>
    %6 = vector.shape_cast %5 : vector<2x1x8xf32> to vector<2x1x8xf32>
    %7 = vector.broadcast %6 : vector<2x1x8xf32> to vector<2x8x8xf32>
    %8 = arith.truncf %4 : vector<16x32xf32> to vector<16x32xbf16>
    %c0_6 = arith.constant 0 : index
    %c0_7 = arith.constant 0 : index
    %c0_8 = arith.constant 0 : index
    %9 = vector.load %arg4[%c0_6, %c0_7, %c0_8] : memref<1x32x96xbf16, #tpu.memory_space<vmem>>, vector<1x32x96xbf16>
    %10 = vector.shape_cast %9 : vector<1x32x96xbf16> to vector<32x96xbf16>
    %cst = arith.constant dense<0.000000e+00> : vector<16x96xf32>
    %11 = tpu.matmul %8, %10, %cst {dimension_numbers = #tpu.dot_dimension_numbers<[1], [0], [0], [1], [0, 0, 1, 1], [], []>} : vector<16x32xbf16>, vector<32x96xbf16>, vector<16x96xf32> -> vector<16x96xf32>
    %c0_9 = arith.constant 0 : index
    %c0_10 = arith.constant 0 : index
    %c0_11 = arith.constant 0 : index
    %12 = vector.load %arg5[%c0_9, %c0_10, %c0_11] : memref<1x1x96xf32, #tpu.memory_space<vmem>>, vector<1x1x96xf32>
    %13 = vector.shape_cast %12 : vector<1x1x96xf32> to vector<1x96xf32>
    %14 = vector.broadcast %13 : vector<1x96xf32> to vector<16x96xf32>
    %15 = arith.addf %11, %14 : vector<16x96xf32>
    %16 = vector.shape_cast %15 : vector<16x96xf32> to vector<2x8x96xf32>
    %17 = arith.truncf %16 : vector<2x8x96xf32> to vector<2x8x96xbf16>
    %18 = vector.extract_strided_slice %17 {offsets = [0, 0, 0], sizes = [2, 8, 32], strides = [1, 1, 1]} : vector<2x8x96xbf16> to vector<2x8x32xbf16>
    %19 = vector.extract_strided_slice %17 {offsets = [0, 0, 32], sizes = [2, 8, 32], strides = [1, 1, 1]} : vector<2x8x96xbf16> to vector<2x8x32xbf16>
    %20 = vector.extract_strided_slice %17 {offsets = [0, 0, 64], sizes = [2, 8, 32], strides = [1, 1, 1]} : vector<2x8x96xbf16> to vector<2x8x32xbf16>
    %21 = vector.extract_strided_slice %18 {offsets = [0, 0, 0], sizes = [2, 8, 8], strides = [1, 1, 1]} : vector<2x8x32xbf16> to vector<2x8x8xbf16>
    %22 = vector.extract_strided_slice %19 {offsets = [0, 0, 0], sizes = [2, 8, 8], strides = [1, 1, 1]} : vector<2x8x32xbf16> to vector<2x8x8xbf16>
    "tpu.trace_start"() <{level = 10 : i32, message = "bqd,bkd->bqk"}> : () -> ()
    %cst_12 = arith.constant dense<0.000000e+00> : vector<2x8x8xf32>
    %23 = tpu.matmul %21, %22, %cst_12 {dimension_numbers = #tpu.dot_dimension_numbers<[2], [2], [1], [1], [0, 0, 0, 1, 1, 1], [0], [0]>} : vector<2x8x8xbf16>, vector<2x8x8xbf16>, vector<2x8x8xf32> -> vector<2x8x8xf32>
    "tpu.trace_stop"() : () -> ()
    %24 = arith.addf %23, %7 : vector<2x8x8xf32>
    %cst_13 = arith.constant dense<0xFF800000> : vector<2x8xf32>
    %25 = vector.multi_reduction <maximumf>, %24, %cst_13 [2] : vector<2x8x8xf32> to vector<2x8xf32>
    %26 = vector.shape_cast %25 : vector<2x8xf32> to vector<2x8x1xf32>
    %27 = vector.broadcast %26 : vector<2x8x1xf32> to vector<2x8x8xf32>
    %28 = arith.subf %24, %27 : vector<2x8x8xf32>
    %29 = math.exp %28 : vector<2x8x8xf32>
    %cst_14 = arith.constant dense<0.000000e+00> : vector<2x8xf32>
    %30 = vector.multi_reduction <add>, %29, %cst_14 [2] : vector<2x8x8xf32> to vector<2x8xf32>
    %31 = vector.shape_cast %30 : vector<2x8xf32> to vector<2x8x1xf32>
    %32 = tpu.reciprocal %31 {approx = true} : vector<2x8x1xf32> -> vector<2x8x1xf32>
    %33 = vector.broadcast %32 : vector<2x8x1xf32> to vector<2x8x8xf32>
    %34 = arith.mulf %29, %33 : vector<2x8x8xf32>
    %35 = arith.truncf %34 : vector<2x8x8xf32> to vector<2x8x8xbf16>
    %36 = vector.extract_strided_slice %20 {offsets = [0, 0, 0], sizes = [2, 8, 8], strides = [1, 1, 1]} : vector<2x8x32xbf16> to vector<2x8x8xbf16>
    "tpu.trace_start"() <{level = 10 : i32, message = "bqk,bkd->bqd"}> : () -> ()
    %cst_15 = arith.constant dense<0.000000e+00> : vector<2x8x8xf32>
    %37 = tpu.matmul %35, %36, %cst_15 {dimension_numbers = #tpu.dot_dimension_numbers<[2], [1], [1], [2], [0, 0, 0, 1, 1, 2], [0], [0]>} : vector<2x8x8xbf16>, vector<2x8x8xbf16>, vector<2x8x8xf32> -> vector<2x8x8xf32>
    "tpu.trace_stop"() : () -> ()
    %c0_16 = arith.constant 0 : index
    %c0_17 = arith.constant 0 : index
    %c0_18 = arith.constant 0 : index
    %38 = vector.load %arg17[%c0_16, %c0_17, %c0_18] : memref<2x8x32xf32, #tpu.memory_space<vmem>>, vector<2x8x8xf32>
    tpu.vector_store %arg17[%c0_16, %c0_17, %c0_18], %37 {strides = array<i32>} : memref<2x8x32xf32, #tpu.memory_space<vmem>>, vector<2x8x8xf32>,
    %39 = vector.extract_strided_slice %18 {offsets = [0, 0, 8], sizes = [2, 8, 8], strides = [1, 1, 1]} : vector<2x8x32xbf16> to vector<2x8x8xbf16>
    %40 = vector.extract_strided_slice %19 {offsets = [0, 0, 8], sizes = [2, 8, 8], strides = [1, 1, 1]} : vector<2x8x32xbf16> to vector<2x8x8xbf16>
    "tpu.trace_start"() <{level = 10 : i32, message = "bqd,bkd->bqk"}> : () -> ()
    %cst_19 = arith.constant dense<0.000000e+00> : vector<2x8x8xf32>
    %41 = tpu.matmul %39, %40, %cst_19 {dimension_numbers = #tpu.dot_dimension_numbers<[2], [2], [1], [1], [0, 0, 0, 1, 1, 1], [0], [0]>} : vector<2x8x8xbf16>, vector<2x8x8xbf16>, vector<2x8x8xf32> -> vector<2x8x8xf32>
    "tpu.trace_stop"() : () -> ()
    %42 = arith.addf %41, %7 : vector<2x8x8xf32>
    %cst_20 = arith.constant dense<0xFF800000> : vector<2x8xf32>
    %43 = vector.multi_reduction <maximumf>, %42, %cst_20 [2] : vector<2x8x8xf32> to vector<2x8xf32>
    %44 = vector.shape_cast %43 : vector<2x8xf32> to vector<2x8x1xf32>
    %45 = vector.broadcast %44 : vector<2x8x1xf32> to vector<2x8x8xf32>
    %46 = arith.subf %42, %45 : vector<2x8x8xf32>
    %47 = math.exp %46 : vector<2x8x8xf32>
    %cst_21 = arith.constant dense<0.000000e+00> : vector<2x8xf32>
    %48 = vector.multi_reduction <add>, %47, %cst_21 [2] : vector<2x8x8xf32> to vector<2x8xf32>
    %49 = vector.shape_cast %48 : vector<2x8xf32> to vector<2x8x1xf32>
    %50 = tpu.reciprocal %49 {approx = true} : vector<2x8x1xf32> -> vector<2x8x1xf32>
    %51 = vector.broadcast %50 : vector<2x8x1xf32> to vector<2x8x8xf32>
    %52 = arith.mulf %47, %51 : vector<2x8x8xf32>
    %53 = arith.truncf %52 : vector<2x8x8xf32> to vector<2x8x8xbf16>
    %54 = vector.extract_strided_slice %20 {offsets = [0, 0, 8], sizes = [2, 8, 8], strides = [1, 1, 1]} : vector<2x8x32xbf16> to vector<2x8x8xbf16>
    "tpu.trace_start"() <{level = 10 : i32, message = "bqk,bkd->bqd"}> : () -> ()
    %cst_22 = arith.constant dense<0.000000e+00> : vector<2x8x8xf32>
    %55 = tpu.matmul %53, %54, %cst_22 {dimension_numbers = #tpu.dot_dimension_numbers<[2], [1], [1], [2], [0, 0, 0, 1, 1, 2], [0], [0]>} : vector<2x8x8xbf16>, vector<2x8x8xbf16>, vector<2x8x8xf32> -> vector<2x8x8xf32>
    "tpu.trace_stop"() : () -> ()
    %c0_23 = arith.constant 0 : index
    %c0_24 = arith.constant 0 : index
    %c8 = arith.constant 8 : index
    %56 = vector.load %arg17[%c0_23, %c0_24, %c8] : memref<2x8x32xf32, #tpu.memory_space<vmem>>, vector<2x8x8xf32>
    tpu.vector_store %arg17[%c0_23, %c0_24, %c8], %55 {strides = array<i32>} : memref<2x8x32xf32, #tpu.memory_space<vmem>>, vector<2x8x8xf32>,
    %57 = vector.extract_strided_slice %18 {offsets = [0, 0, 16], sizes = [2, 8, 8], strides = [1, 1, 1]} : vector<2x8x32xbf16> to vector<2x8x8xbf16>
    %58 = vector.extract_strided_slice %19 {offsets = [0, 0, 16], sizes = [2, 8, 8], strides = [1, 1, 1]} : vector<2x8x32xbf16> to vector<2x8x8xbf16>
    "tpu.trace_start"() <{level = 10 : i32, message = "bqd,bkd->bqk"}> : () -> ()
    %cst_25 = arith.constant dense<0.000000e+00> : vector<2x8x8xf32>
    %59 = tpu.matmul %57, %58, %cst_25 {dimension_numbers = #tpu.dot_dimension_numbers<[2], [2], [1], [1], [0, 0, 0, 1, 1, 1], [0], [0]>} : vector<2x8x8xbf16>, vector<2x8x8xbf16>, vector<2x8x8xf32> -> vector<2x8x8xf32>
    "tpu.trace_stop"() : () -> ()
    %60 = arith.addf %59, %7 : vector<2x8x8xf32>
    %cst_26 = arith.constant dense<0xFF800000> : vector<2x8xf32>
    %61 = vector.multi_reduction <maximumf>, %60, %cst_26 [2] : vector<2x8x8xf32> to vector<2x8xf32>
    %62 = vector.shape_cast %61 : vector<2x8xf32> to vector<2x8x1xf32>
    %63 = vector.broadcast %62 : vector<2x8x1xf32> to vector<2x8x8xf32>
    %64 = arith.subf %60, %63 : vector<2x8x8xf32>
    %65 = math.exp %64 : vector<2x8x8xf32>
    %cst_27 = arith.constant dense<0.000000e+00> : vector<2x8xf32>
    %66 = vector.multi_reduction <add>, %65, %cst_27 [2] : vector<2x8x8xf32> to vector<2x8xf32>
    %67 = vector.shape_cast %66 : vector<2x8xf32> to vector<2x8x1xf32>
    %68 = tpu.reciprocal %67 {approx = true} : vector<2x8x1xf32> -> vector<2x8x1xf32>
    %69 = vector.broadcast %68 : vector<2x8x1xf32> to vector<2x8x8xf32>
    %70 = arith.mulf %65, %69 : vector<2x8x8xf32>
    %71 = arith.truncf %70 : vector<2x8x8xf32> to vector<2x8x8xbf16>
    %72 = vector.extract_strided_slice %20 {offsets = [0, 0, 16], sizes = [2, 8, 8], strides = [1, 1, 1]} : vector<2x8x32xbf16> to vector<2x8x8xbf16>
    "tpu.trace_start"() <{level = 10 : i32, message = "bqk,bkd->bqd"}> : () -> ()
    %cst_28 = arith.constant dense<0.000000e+00> : vector<2x8x8xf32>
    %73 = tpu.matmul %71, %72, %cst_28 {dimension_numbers = #tpu.dot_dimension_numbers<[2], [1], [1], [2], [0, 0, 0, 1, 1, 2], [0], [0]>} : vector<2x8x8xbf16>, vector<2x8x8xbf16>, vector<2x8x8xf32> -> vector<2x8x8xf32>
    "tpu.trace_stop"() : () -> ()
    %c0_29 = arith.constant 0 : index
    %c0_30 = arith.constant 0 : index
    %c16 = arith.constant 16 : index
    %74 = vector.load %arg17[%c0_29, %c0_30, %c16] : memref<2x8x32xf32, #tpu.memory_space<vmem>>, vector<2x8x8xf32>
    tpu.vector_store %arg17[%c0_29, %c0_30, %c16], %73 {strides = array<i32>} : memref<2x8x32xf32, #tpu.memory_space<vmem>>, vector<2x8x8xf32>,
    %75 = vector.extract_strided_slice %18 {offsets = [0, 0, 24], sizes = [2, 8, 8], strides = [1, 1, 1]} : vector<2x8x32xbf16> to vector<2x8x8xbf16>
    %76 = vector.extract_strided_slice %19 {offsets = [0, 0, 24], sizes = [2, 8, 8], strides = [1, 1, 1]} : vector<2x8x32xbf16> to vector<2x8x8xbf16>
    "tpu.trace_start"() <{level = 10 : i32, message = "bqd,bkd->bqk"}> : () -> ()
    %cst_31 = arith.constant dense<0.000000e+00> : vector<2x8x8xf32>
    %77 = tpu.matmul %75, %76, %cst_31 {dimension_numbers = #tpu.dot_dimension_numbers<[2], [2], [1], [1], [0, 0, 0, 1, 1, 1], [0], [0]>} : vector<2x8x8xbf16>, vector<2x8x8xbf16>, vector<2x8x8xf32> -> vector<2x8x8xf32>
    "tpu.trace_stop"() : () -> ()
    %78 = arith.addf %77, %7 : vector<2x8x8xf32>
    %cst_32 = arith.constant dense<0xFF800000> : vector<2x8xf32>
    %79 = vector.multi_reduction <maximumf>, %78, %cst_32 [2] : vector<2x8x8xf32> to vector<2x8xf32>
    %80 = vector.shape_cast %79 : vector<2x8xf32> to vector<2x8x1xf32>
    %81 = vector.broadcast %80 : vector<2x8x1xf32> to vector<2x8x8xf32>
    %82 = arith.subf %78, %81 : vector<2x8x8xf32>
    %83 = math.exp %82 : vector<2x8x8xf32>
    %cst_33 = arith.constant dense<0.000000e+00> : vector<2x8xf32>
    %84 = vector.multi_reduction <add>, %83, %cst_33 [2] : vector<2x8x8xf32> to vector<2x8xf32>
    %85 = vector.shape_cast %84 : vector<2x8xf32> to vector<2x8x1xf32>
    %86 = tpu.reciprocal %85 {approx = true} : vector<2x8x1xf32> -> vector<2x8x1xf32>
    %87 = vector.broadcast %86 : vector<2x8x1xf32> to vector<2x8x8xf32>
    %88 = arith.mulf %83, %87 : vector<2x8x8xf32>
    %89 = arith.truncf %88 : vector<2x8x8xf32> to vector<2x8x8xbf16>
    %90 = vector.extract_strided_slice %20 {offsets = [0, 0, 24], sizes = [2, 8, 8], strides = [1, 1, 1]} : vector<2x8x32xbf16> to vector<2x8x8xbf16>
    "tpu.trace_start"() <{level = 10 : i32, message = "bqk,bkd->bqd"}> : () -> ()
    %cst_34 = arith.constant dense<0.000000e+00> : vector<2x8x8xf32>
    %91 = tpu.matmul %89, %90, %cst_34 {dimension_numbers = #tpu.dot_dimension_numbers<[2], [1], [1], [2], [0, 0, 0, 1, 1, 2], [0], [0]>} : vector<2x8x8xbf16>, vector<2x8x8xbf16>, vector<2x8x8xf32> -> vector<2x8x8xf32>
    "tpu.trace_stop"() : () -> ()
    %c0_35 = arith.constant 0 : index
    %c0_36 = arith.constant 0 : index
    %c24 = arith.constant 24 : index
    %92 = vector.load %arg17[%c0_35, %c0_36, %c24] : memref<2x8x32xf32, #tpu.memory_space<vmem>>, vector<2x8x8xf32>
    tpu.vector_store %arg17[%c0_35, %c0_36, %c24], %91 {strides = array<i32>} : memref<2x8x32xf32, #tpu.memory_space<vmem>>, vector<2x8x8xf32>,
    %c0_37 = arith.constant 0 : index
    %c0_38 = arith.constant 0 : index
    %c0_39 = arith.constant 0 : index
    %93 = vector.load %arg17[%c0_37, %c0_38, %c0_39] : memref<2x8x32xf32, #tpu.memory_space<vmem>>, vector<2x8x32xf32>
    %94 = vector.shape_cast %93 : vector<2x8x32xf32> to vector<16x32xf32>
    %95 = arith.truncf %94 : vector<16x32xf32> to vector<16x32xbf16>
    %c0_40 = arith.constant 0 : index
    %c0_41 = arith.constant 0 : index
    %c0_42 = arith.constant 0 : index
    %96 = vector.load %arg6[%c0_40, %c0_41, %c0_42] : memref<1x32x32xbf16, #tpu.memory_space<vmem>>, vector<1x32x32xbf16>
    %97 = vector.shape_cast %96 : vector<1x32x32xbf16> to vector<32x32xbf16>
    %cst_43 = arith.constant dense<0.000000e+00> : vector<16x32xf32>
    %98 = tpu.matmul %95, %97, %cst_43 {dimension_numbers = #tpu.dot_dimension_numbers<[1], [0], [0], [1], [0, 0, 1, 1], [], []>} : vector<16x32xbf16>, vector<32x32xbf16>, vector<16x32xf32> -> vector<16x32xf32>
    %c0_44 = arith.constant 0 : index
    %c0_45 = arith.constant 0 : index
    %c0_46 = arith.constant 0 : index
    %99 = vector.load %arg7[%c0_44, %c0_45, %c0_46] : memref<1x1x32xf32, #tpu.memory_space<vmem>>, vector<1x1x32xf32>
    %100 = vector.shape_cast %99 : vector<1x1x32xf32> to vector<1x32xf32>
    %101 = vector.broadcast %100 : vector<1x32xf32> to vector<16x32xf32>
    %102 = arith.addf %98, %101 : vector<16x32xf32>
    %103 = arith.addf %4, %102 : vector<16x32xf32>
    %c0_47 = arith.constant 0 : index
    %c0_48 = arith.constant 0 : index
    %c0_49 = arith.constant 0 : index
    %104 = vector.load %arg8[%c0_47, %c0_48, %c0_49] : memref<1x1x32xf32, #tpu.memory_space<vmem>>, vector<1x1x32xf32>
    %105 = vector.shape_cast %104 : vector<1x1x32xf32> to vector<1x32xf32>
    %c0_50 = arith.constant 0 : index
    %c0_51 = arith.constant 0 : index
    %c0_52 = arith.constant 0 : index
    %106 = vector.load %arg9[%c0_50, %c0_51, %c0_52] : memref<1x1x32xf32, #tpu.memory_space<vmem>>, vector<1x1x32xf32>
    %107 = vector.shape_cast %106 : vector<1x1x32xf32> to vector<1x32xf32>
    %cst_53 = arith.constant dense<0.000000e+00> : vector<16xf32>
    %108 = vector.multi_reduction <add>, %103, %cst_53 [1] : vector<16x32xf32> to vector<16xf32>
    %109 = vector.shape_cast %108 : vector<16xf32> to vector<16x1xf32>
    %cst_54 = arith.constant 3.200000e+01 : f32
    %110 = vector.broadcast %cst_54 : f32 to vector<16x1xf32>
    %111 = arith.divf %109, %110 : vector<16x1xf32>
    %112 = arith.mulf %103, %103 : vector<16x32xf32>
    %cst_55 = arith.constant dense<0.000000e+00> : vector<16xf32>
    %113 = vector.multi_reduction <add>, %112, %cst_55 [1] : vector<16x32xf32> to vector<16xf32>
    %114 = vector.shape_cast %113 : vector<16xf32> to vector<16x1xf32>
    %cst_56 = arith.constant 3.200000e+01 : f32
    %115 = vector.broadcast %cst_56 : f32 to vector<16x1xf32>
    %116 = arith.divf %114, %115 : vector<16x1xf32>
    %117 = arith.mulf %111, %111 : vector<16x1xf32>
    %118 = arith.subf %116, %117 : vector<16x1xf32>
    %cst_57 = arith.constant 0.000000e+00 : f32
    %119 = vector.broadcast %cst_57 : f32 to vector<16x1xf32>
    %120 = arith.maximumf %118, %119 : vector<16x1xf32>
    %121 = vector.broadcast %111 : vector<16x1xf32> to vector<16x32xf32>
    %122 = arith.subf %103, %121 : vector<16x32xf32>
    %cst_58 = arith.constant 9.99999974E-6 : f32
    %123 = vector.broadcast %cst_58 : f32 to vector<16x1xf32>
    %124 = arith.addf %120, %123 : vector<16x1xf32>
    %125 = math.rsqrt %124 : vector<16x1xf32>
    %126 = vector.broadcast %125 : vector<16x1xf32> to vector<16x32xf32>
    %127 = arith.mulf %122, %126 : vector<16x32xf32>
    %128 = vector.broadcast %105 : vector<1x32xf32> to vector<16x32xf32>
    %129 = arith.mulf %127, %128 : vector<16x32xf32>
    %130 = vector.broadcast %107 : vector<1x32xf32> to vector<16x32xf32>
    %131 = arith.addf %129, %130 : vector<16x32xf32>
    %132 = arith.truncf %131 : vector<16x32xf32> to vector<16x32xbf16>
    %cst_59 = arith.constant 0.000000e+00 : f32
    %133 = vector.broadcast %cst_59 : f32 to vector<16x32xf32>
    %c0_60 = arith.constant 0 : index
    %c0_61 = arith.constant 0 : index
    %c0_62 = arith.constant 0 : index
    %134 = vector.load %arg10[%c0_60, %c0_61, %c0_62] : memref<1x32x64xbf16, #tpu.memory_space<vmem>>, vector<1x32x64xbf16>
    %135 = vector.shape_cast %134 : vector<1x32x64xbf16> to vector<32x64xbf16>
    %cst_63 = arith.constant dense<0.000000e+00> : vector<16x64xf32>
    %136 = tpu.matmul %132, %135, %cst_63 {dimension_numbers = #tpu.dot_dimension_numbers<[1], [0], [0], [1], [0, 0, 1, 1], [], []>} : vector<16x32xbf16>, vector<32x64xbf16>, vector<16x64xf32> -> vector<16x64xf32>
    %c0_64 = arith.constant 0 : index
    %c0_65 = arith.constant 0 : index
    %c0_66 = arith.constant 0 : index
    %137 = vector.load %arg11[%c0_64, %c0_65, %c0_66] : memref<1x1x64xf32, #tpu.memory_space<vmem>>, vector<1x1x64xf32>
    %138 = vector.shape_cast %137 : vector<1x1x64xf32> to vector<1x64xf32>
    %139 = vector.broadcast %138 : vector<1x64xf32> to vector<16x64xf32>
    %140 = arith.addf %136, %139 : vector<16x64xf32>
    %cst_67 = arith.constant 0.000000e+00 : f32
    %141 = vector.broadcast %cst_67 : f32 to vector<16x64xf32>
    %142 = arith.maximumf %140, %141 : vector<16x64xf32>
    %143 = arith.truncf %142 : vector<16x64xf32> to vector<16x64xbf16>
    %c0_68 = arith.constant 0 : index
    %c0_69 = arith.constant 0 : index
    %c0_70 = arith.constant 0 : index
    %144 = vector.load %arg12[%c0_68, %c0_69, %c0_70] : memref<1x64x32xbf16, #tpu.memory_space<vmem>>, vector<1x64x32xbf16>
    %145 = vector.shape_cast %144 : vector<1x64x32xbf16> to vector<64x32xbf16>
    %cst_71 = arith.constant dense<0.000000e+00> : vector<16x32xf32>
    %146 = tpu.matmul %143, %145, %cst_71 {dimension_numbers = #tpu.dot_dimension_numbers<[1], [0], [0], [1], [0, 0, 1, 1], [], []>} : vector<16x64xbf16>, vector<64x32xbf16>, vector<16x32xf32> -> vector<16x32xf32>
    %147 = arith.addf %133, %146 : vector<16x32xf32>
    %148 = arith.addf %131, %147 : vector<16x32xf32>
    %c0_72 = arith.constant 0 : index
    %c0_73 = arith.constant 0 : index
    %c0_74 = arith.constant 0 : index
    %149 = vector.load %arg13[%c0_72, %c0_73, %c0_74] : memref<1x1x32xf32, #tpu.memory_space<vmem>>, vector<1x1x32xf32>
    %150 = vector.shape_cast %149 : vector<1x1x32xf32> to vector<1x32xf32>
    %151 = vector.broadcast %150 : vector<1x32xf32> to vector<16x32xf32>
    %152 = arith.addf %148, %151 : vector<16x32xf32>
    %c0_75 = arith.constant 0 : index
    %c0_76 = arith.constant 0 : index
    %c0_77 = arith.constant 0 : index
    %153 = vector.load %arg14[%c0_75, %c0_76, %c0_77] : memref<1x1x32xf32, #tpu.memory_space<vmem>>, vector<1x1x32xf32>
    %154 = vector.shape_cast %153 : vector<1x1x32xf32> to vector<1x32xf32>
    %c0_78 = arith.constant 0 : index
    %c0_79 = arith.constant 0 : index
    %c0_80 = arith.constant 0 : index
    %155 = vector.load %arg15[%c0_78, %c0_79, %c0_80] : memref<1x1x32xf32, #tpu.memory_space<vmem>>, vector<1x1x32xf32>
    %156 = vector.shape_cast %155 : vector<1x1x32xf32> to vector<1x32xf32>
    %cst_81 = arith.constant dense<0.000000e+00> : vector<16xf32>
    %157 = vector.multi_reduction <add>, %152, %cst_81 [1] : vector<16x32xf32> to vector<16xf32>
    %158 = vector.shape_cast %157 : vector<16xf32> to vector<16x1xf32>
    %cst_82 = arith.constant 3.200000e+01 : f32
    %159 = vector.broadcast %cst_82 : f32 to vector<16x1xf32>
    %160 = arith.divf %158, %159 : vector<16x1xf32>
    %161 = arith.mulf %152, %152 : vector<16x32xf32>
    %cst_83 = arith.constant dense<0.000000e+00> : vector<16xf32>
    %162 = vector.multi_reduction <add>, %161, %cst_83 [1] : vector<16x32xf32> to vector<16xf32>
    %163 = vector.shape_cast %162 : vector<16xf32> to vector<16x1xf32>
    %cst_84 = arith.constant 3.200000e+01 : f32
    %164 = vector.broadcast %cst_84 : f32 to vector<16x1xf32>
    %165 = arith.divf %163, %164 : vector<16x1xf32>
    %166 = arith.mulf %160, %160 : vector<16x1xf32>
    %167 = arith.subf %165, %166 : vector<16x1xf32>
    %cst_85 = arith.constant 0.000000e+00 : f32
    %168 = vector.broadcast %cst_85 : f32 to vector<16x1xf32>
    %169 = arith.maximumf %167, %168 : vector<16x1xf32>
    %170 = vector.broadcast %160 : vector<16x1xf32> to vector<16x32xf32>
    %171 = arith.subf %152, %170 : vector<16x32xf32>
    %cst_86 = arith.constant 9.99999974E-6 : f32
    %172 = vector.broadcast %cst_86 : f32 to vector<16x1xf32>
    %173 = arith.addf %169, %172 : vector<16x1xf32>
    %174 = math.rsqrt %173 : vector<16x1xf32>
    %175 = vector.broadcast %174 : vector<16x1xf32> to vector<16x32xf32>
    %176 = arith.mulf %171, %175 : vector<16x32xf32>
    %177 = vector.broadcast %154 : vector<1x32xf32> to vector<16x32xf32>
    %178 = arith.mulf %176, %177 : vector<16x32xf32>
    %179 = vector.broadcast %156 : vector<1x32xf32> to vector<16x32xf32>
    %180 = arith.addf %178, %179 : vector<16x32xf32>
    %181 = vector.shape_cast %180 : vector<16x32xf32> to vector<2x8x32xf32>
    %c0_87 = arith.constant 0 : index
    %c0_88 = arith.constant 0 : index
    %c0_89 = arith.constant 0 : index
    %182 = vector.load %arg16[%c0_87, %c0_88, %c0_89] : memref<2x8x32xf32, #tpu.memory_space<vmem>>, vector<2x8x32xf32>
    tpu.vector_store %arg16[%c0_87, %c0_88, %c0_89], %181 {strides = array<i32>} : memref<2x8x32xf32, #tpu.memory_space<vmem>>, vector<2x8x32xf32>,
    return
  }
  func.func @transform_0(%arg0: i32, %arg1: i32) -> (i32, i32, i32) {
    %c0_i32 = arith.constant 0 : i32
    %c0_i32_0 = arith.constant 0 : i32
    %c0_i32_1 = arith.constant 0 : i32
    return %arg0, %c0_i32, %c0_i32_0 : i32, i32, i32
  }
  func.func @transform_1(%arg0: i32, %arg1: i32) -> (i32, i32, i32) {
    %c0_i32 = arith.constant 0 : i32
    %c0_i32_0 = arith.constant 0 : i32
    %c0_i32_1 = arith.constant 0 : i32
    return %arg0, %c0_i32, %c0_i32_0 : i32, i32, i32
  }
  func.func @transform_2(%arg0: i32, %arg1: i32) -> (i32, i32, i32) {
    %c0_i32 = arith.constant 0 : i32
    %c0_i32_0 = arith.constant 0 : i32
    %c0_i32_1 = arith.constant 0 : i32
    return %arg1, %c0_i32, %c0_i32_0 : i32, i32, i32
  }
  func.func @transform_3(%arg0: i32, %arg1: i32) -> (i32, i32, i32) {
    %c0_i32 = arith.constant 0 : i32
    %c0_i32_0 = arith.constant 0 : i32
    %c0_i32_1 = arith.constant 0 : i32
    return %arg1, %c0_i32, %c0_i32_0 : i32, i32, i32
  }
  func.func @transform_4(%arg0: i32, %arg1: i32) -> (i32, i32, i32) {
    %c0_i32 = arith.constant 0 : i32
    %c0_i32_0 = arith.constant 0 : i32
    %c0_i32_1 = arith.constant 0 : i32
    return %arg1, %c0_i32, %c0_i32_0 : i32, i32, i32
  }
  func.func @transform_5(%arg0: i32, %arg1: i32) -> (i32, i32, i32) {
    %c0_i32 = arith.constant 0 : i32
    %c0_i32_0 = arith.constant 0 : i32
    %c0_i32_1 = arith.constant 0 : i32
    return %arg1, %c0_i32, %c0_i32_0 : i32, i32, i32
  }
  func.func @transform_6(%arg0: i32, %arg1: i32) -> (i32, i32, i32) {
    %c0_i32 = arith.constant 0 : i32
    %c0_i32_0 = arith.constant 0 : i32
    %c0_i32_1 = arith.constant 0 : i32
    return %arg1, %c0_i32, %c0_i32_0 : i32, i32, i32
  }
  func.func @transform_7(%arg0: i32, %arg1: i32) -> (i32, i32, i32) {
    %c0_i32 = arith.constant 0 : i32
    %c0_i32_0 = arith.constant 0 : i32
    %c0_i32_1 = arith.constant 0 : i32
    return %arg1, %c0_i32, %c0_i32_0 : i32, i32, i32
  }
  func.func @transform_8(%arg0: i32, %arg1: i32) -> (i32, i32, i32) {
    %c0_i32 = arith.constant 0 : i32
    %c0_i32_0 = arith.constant 0 : i32
    %c0_i32_1 = arith.constant 0 : i32
    return %arg1, %c0_i32, %c0_i32_0 : i32, i32, i32
  }
  func.func @transform_9(%arg0: i32, %arg1: i32) -> (i32, i32, i32) {
    %c0_i32 = arith.constant 0 : i32
    %c0_i32_0 = arith.constant 0 : i32
    %c0_i32_1 = arith.constant 0 : i32
    return %arg1, %c0_i32, %c0_i32_0 : i32, i32, i32
  }
  func.func @transform_10(%arg0: i32, %arg1: i32) -> (i32, i32, i32) {
    %c0_i32 = arith.constant 0 : i32
    %c0_i32_0 = arith.constant 0 : i32
    %c0_i32_1 = arith.constant 0 : i32
    return %arg1, %c0_i32, %c0_i32_0 : i32, i32, i32
  }
  func.func @transform_11(%arg0: i32, %arg1: i32) -> (i32, i32, i32) {
    %c0_i32 = arith.constant 0 : i32
    %c0_i32_0 = arith.constant 0 : i32
    %c0_i32_1 = arith.constant 0 : i32
    return %arg1, %c0_i32, %c0_i32_0 : i32, i32, i32
  }
  func.func @transform_12(%arg0: i32, %arg1: i32) -> (i32, i32, i32) {
    %c0_i32 = arith.constant 0 : i32
    %c0_i32_0 = arith.constant 0 : i32
    %c0_i32_1 = arith.constant 0 : i32
    return %arg1, %c0_i32, %c0_i32_0 : i32, i32, i32
  }
  func.func @transform_13(%arg0: i32, %arg1: i32) -> (i32, i32, i32) {
    %c0_i32 = arith.constant 0 : i32
    %c0_i32_0 = arith.constant 0 : i32
    %c0_i32_1 = arith.constant 0 : i32
    return %arg1, %c0_i32, %c0_i32_0 : i32, i32, i32
  }
  func.func @transform_14(%arg0: i32, %arg1: i32) -> (i32, i32, i32) {
    %c0_i32 = arith.constant 0 : i32
    %c0_i32_0 = arith.constant 0 : i32
    %c0_i32_1 = arith.constant 0 : i32
    return %arg0, %c0_i32, %c0_i32_0 : i32, i32, i32
  }
}

</mosaic_0001>

<llo_original>
// kernel: tpu_custom_call.1
$region0: #{tpu_custom_call.1}
  #allocation0 [shape = 'u32[]', space=smem, size = 0x4, offset = 0x4, fixed_abs, tag = 'smem constant byte address 0x4 - core index']
  #allocation1 [shape = 'u32[144,128]{1,0:T(1,128)}', space=vmem, size = 0x12000, scoped, tag = 'internal scratch']
  #allocation2 [shape = 'f32[2,8,32]{2,1,0:T(8,128)}', space=vmem, size = 0x2000, scoped, tag = 'scratch operand']
  %s0 = inlined_call_operand.hbm [shape: f32[2,8,32], index: 0, kind: input, shape index: {}]
  %s1 = inlined_call_operand.vmem [shape: f32[2,1,8], index: 1, kind: input, shape index: {}]
  %s2 = inlined_call_operand.vmem [shape: bf16[2,32,96], index: 2, kind: input, shape index: {}]
  %s3 = inlined_call_operand.vmem [shape: f32[2,1,96], index: 3, kind: input, shape index: {}]
  %s4 = inlined_call_operand.vmem [shape: bf16[2,32,32], index: 4, kind: input, shape index: {}]
  %s5 = inlined_call_operand.hbm [shape: f32[2,1,32], index: 5, kind: input, shape index: {}]
  %s6 = inlined_call_operand.hbm [shape: f32[2,1,32], index: 6, kind: input, shape index: {}]
  %s7 = inlined_call_operand.hbm [shape: f32[2,1,32], index: 7, kind: input, shape index: {}]
  %s8 = inlined_call_operand.vmem [shape: bf16[2,32,64], index: 8, kind: input, shape index: {}]
  %s9 = inlined_call_operand.hbm [shape: f32[2,1,64], index: 9, kind: input, shape index: {}]
  %s10 = inlined_call_operand.vmem [shape: bf16[2,64,32], index: 10, kind: input, shape index: {}]
  %s11 = inlined_call_operand.vmem [shape: f32[2,1,32], index: 11, kind: input, shape index: {}]
  %s12 = inlined_call_operand.vmem [shape: f32[2,1,32], index: 12, kind: input, shape index: {}]
  %s13 = inlined_call_operand.vmem [shape: f32[2,1,32], index: 13, kind: input, shape index: {}]
  %s14 = inlined_call_operand.hbm [shape: f32[2,8,32], index: 14, kind: output, shape index: {}]
  %s15 = sld [smem:[#allocation0]]
  $region113: #{tpu_custom_call.1} parent=0
    _
  %s17 = ssub.s32 1, %s15
  %s18 = scalar_select 0, %s17, %s15
  $region1: #{tpu_custom_call.1} parent=0
    #allocation3 [shape = 'u8[8192]{0}', space=vmem, size = 0x2000, scoped, tag = 'input window, operand 0, single buffered']
    #allocation4 [shape = 's32[2]{0}', space=sflag, size = 0x8, scoped, tag = 'scoped memory for tpu_custom_call.1']
    #allocation5 [shape = 's32[2]{0}', space=sflag, size = 0x8, scoped, tag = 'scoped memory for tpu_custom_call.1']
    #allocation6 [shape = 'u8[1024]{0}', space=vmem, size = 0x400, scoped, tag = 'input window, operand 5']
    #allocation7 [shape = 's32[2]{0}', space=sflag, size = 0x8, scoped, tag = 'scoped memory for tpu_custom_call.1']
    #allocation8 [shape = 'u8[1024]{0}', space=vmem, size = 0x400, scoped, tag = 'input window, operand 6']
    #allocation9 [shape = 'u8[1024]{0}', space=vmem, size = 0x400, scoped, tag = 'input window, operand 7']
    #allocation10 [shape = 's32[2]{0}', space=sflag, size = 0x8, scoped, tag = 'scoped memory for tpu_custom_call.1']
    #allocation11 [shape = 'u8[1024]{0}', space=vmem, size = 0x400, scoped, tag = 'input window, operand 9']
    #allocation12 [shape = 'u8[8192]{0}', space=vmem, size = 0x2000, scoped, tag = 'output window, operand 0, single buffered']
    %19 = vsyncpa [#allocation4], 0
    %20 = vsyncpa [#allocation7], 0
    %s21 = scalar_lea.sflag [#allocation7], 1
    %22 = vsyncpa %s21, 0
    %23 = vsyncpa [#allocation10], 0
    %s24 = scalar_lea.sflag [#allocation10], 1
    %25 = vsyncpa %s24, 0
    %26 = vsyncpa [#allocation5], 0
    loop: start=0, step=1, limit=4
    $region2: #{tpu_custom_call.1} parent=1 // loop_pre_header
      _
    $region3: #{tpu_custom_call.1} parent=1 // loop_header
      %s28 = sphi 0, %s32
      %p29 = scmp.ge.s32.totalorder %s28, 4
      %s35 = sphi 0, %s47
      %s36 = sphi 0, %s43
      %s37 = sphi 0, %s35
      %s38 = sphi 0, %s36
      %s39 = sphi 0, %s37
      %s40 = sphi 0, %s38
      %s50 = sphi 0, %s52
      %s53 = sphi 0, %s50
      %s54 = sphi 0, %s53
      %s70 = sphi 0, %s54
      %s76 = sphi 0, %s78
      %s79 = sphi 0, %s76
      %s80 = sphi 0, %s79
      %s96 = sphi 0, %s80
      %s102 = sphi 0, %s104
      %s105 = sphi 0, %s102
      %s106 = sphi 0, %s105
      %s122 = sphi 0, %s106
      %s128 = sphi 0, %s130
      %s131 = sphi 0, %s128
      %s132 = sphi 0, %s131
      %s148 = sphi 0, %s132
      %s154 = sphi 0, %s156
      %s157 = sphi 0, %s154
      %s158 = sphi 0, %s157
      %s174 = sphi 0, %s158
      %s180 = sphi 0, %s182
      %s183 = sphi 0, %s180
      %s184 = sphi 0, %s183
      %s200 = sphi 0, %s184
      %s206 = sphi 0, %s208
      %s209 = sphi 0, %s206
      %s210 = sphi 0, %s209
      %s226 = sphi 0, %s210
      %s232 = sphi 0, %s234
      %s235 = sphi 0, %s232
      %s236 = sphi 0, %s235
      %s252 = sphi 0, %s236
      %s258 = sphi 0, %s260
      %s261 = sphi 0, %s258
      %s262 = sphi 0, %s261
      %s278 = sphi 0, %s262
      %s284 = sphi 0, %s286
      %s287 = sphi 0, %s284
      %s288 = sphi 0, %s287
      %s304 = sphi 0, %s288
      %s310 = sphi 0, %s312
      %s313 = sphi 0, %s310
      %s314 = sphi 0, %s313
      %s330 = sphi 0, %s314
      %s336 = sphi 0, %s338
      %s339 = sphi 0, %s336
      %s340 = sphi 0, %s339
      %s356 = sphi 0, %s340
      %s362 = sphi 0, %s364
      %s365 = sphi 0, %s362
      %s366 = sphi 0, %s365
      %s382 = sphi 0, %s366
      %s388 = sphi 0, %s390
      %s391 = sphi 0, %s388
      %s392 = sphi 0, %s391
      %s408 = sphi 0, %s392
      %s414 = sphi 0, %s416
      %s417 = sphi 0, %s414
      %s418 = sphi 0, %s417
      %s434 = sphi 0, %s418
    $region4: #{tpu_custom_call.1} parent=1 // loop_header_branch
      %31 = sbr.rel (%p29) target = $region8
    $region5: #{tpu_custom_call.1} parent=1 // loop_body
      %s33 = ssub.s32 %s28, 1
      %s34 = ssub.s32 %s28, 2
      %s41 = sadd.s32 1, %s36
      %p42 = scmp.ge.s32.totalorder %s41, 2
      %s43 = scalar_select %p42, 0, %s41
      %s44 = sadd.s32 1, %s35
      %s45 = scalar_select %p42, %s44, %s35
      %p46 = scmp.ge.s32.totalorder %s45, 1
      %s47 = scalar_select %p46, 0, %s45
      %s48 = ssub.s32 %s35, %s47
      %p49 = scmp.eq.s32.totalorder %s48, 0
      %s51 = sadd.s32 %s50, 1
      %s52 = scalar_select %p49, %s50, %s51
      %p55 = pneg %p49
      %p56 = scmp.eq.s32.totalorder %s28, 1
      %p57 = por %p55, %p56
      %p58 = scmp.ne.s32.totalorder %s50, %s53
      %p59 = scmp.eq.s32.totalorder %s28, 0
      %p60 = por %p58, %p59
      %p61 = scmp.ne.s32.totalorder %s50, %s53
      %p62 = scmp.eq.s32.totalorder %s33, 1
      %p63 = por %p61, %p62
      %p64 = scmp.ne.s32.totalorder %s53, %s54
      %p65 = scmp.eq.s32.totalorder %s33, 0
      %p66 = por %p64, %p65
      %p67 = scmp.ne.s32.totalorder %s53, %s54
      %p68 = scmp.eq.s32.totalorder %s34, 1
      %p69 = por %p67, %p68
      %p71 = scmp.ne.s32.totalorder %s54, %s70
      %p72 = scmp.eq.s32.totalorder %s34, 0
      %p73 = por %p71, %p72
      %s74 = ssub.s32 %s35, %s47
      %p75 = scmp.eq.s32.totalorder %s74, 0
      %s77 = sadd.s32 %s76, 1
      %s78 = scalar_select %p75, %s76, %s77
      %p81 = pneg %p75
      %p82 = scmp.eq.s32.totalorder %s28, 1
      %p83 = por %p81, %p82
      %p84 = scmp.ne.s32.totalorder %s76, %s79
      %p85 = scmp.eq.s32.totalorder %s28, 0
      %p86 = por %p84, %p85
      %p87 = scmp.ne.s32.totalorder %s76, %s79
      %p88 = scmp.eq.s32.totalorder %s33, 1
      %p89 = por %p87, %p88
      %p90 = scmp.ne.s32.totalorder %s79, %s80
      %p91 = scmp.eq.s32.totalorder %s33, 0
      %p92 = por %p90, %p91
      %p93 = scmp.ne.s32.totalorder %s79, %s80
      %p94 = scmp.eq.s32.totalorder %s34, 1
      %p95 = por %p93, %p94
      %p97 = scmp.ne.s32.totalorder %s80, %s96
      %p98 = scmp.eq.s32.totalorder %s34, 0
      %p99 = por %p97, %p98
      %s100 = ssub.s32 %s36, %s43
      %p101 = scmp.eq.s32.totalorder %s100, 0
      %s103 = sadd.s32 %s102, 1
      %s104 = scalar_select %p101, %s102, %s103
      %p107 = pneg %p101
      %p108 = scmp.eq.s32.totalorder %s28, 1
      %p109 = por %p107, %p108
      %p110 = scmp.ne.s32.totalorder %s102, %s105
      %p111 = scmp.eq.s32.totalorder %s28, 0
      %p112 = por %p110, %p111
      %p113 = scmp.ne.s32.totalorder %s102, %s105
      %p114 = scmp.eq.s32.totalorder %s33, 1
      %p115 = por %p113, %p114
      %p116 = scmp.ne.s32.totalorder %s105, %s106
      %p117 = scmp.eq.s32.totalorder %s33, 0
      %p118 = por %p116, %p117
      %p119 = scmp.ne.s32.totalorder %s105, %s106
      %p120 = scmp.eq.s32.totalorder %s34, 1
      %p121 = por %p119, %p120
      %p123 = scmp.ne.s32.totalorder %s106, %s122
      %p124 = scmp.eq.s32.totalorder %s34, 0
      %p125 = por %p123, %p124
      %s126 = ssub.s32 %s36, %s43
      %p127 = scmp.eq.s32.totalorder %s126, 0
      %s129 = sadd.s32 %s128, 1
      %s130 = scalar_select %p127, %s128, %s129
      %p133 = pneg %p127
      %p134 = scmp.eq.s32.totalorder %s28, 1
      %p135 = por %p133, %p134
      %p136 = scmp.ne.s32.totalorder %s128, %s131
      %p137 = scmp.eq.s32.totalorder %s28, 0
      %p138 = por %p136, %p137
      %p139 = scmp.ne.s32.totalorder %s128, %s131
      %p140 = scmp.eq.s32.totalorder %s33, 1
      %p141 = por %p139, %p140
      %p142 = scmp.ne.s32.totalorder %s131, %s132
      %p143 = scmp.eq.s32.totalorder %s33, 0
      %p144 = por %p142, %p143
      %p145 = scmp.ne.s32.totalorder %s131, %s132
      %p146 = scmp.eq.s32.totalorder %s34, 1
      %p147 = por %p145, %p146
      %p149 = scmp.ne.s32.totalorder %s132, %s148
      %p150 = scmp.eq.s32.totalorder %s34, 0
      %p151 = por %p149, %p150
      %s152 = ssub.s32 %s36, %s43
      %p153 = scmp.eq.s32.totalorder %s152, 0
      %s155 = sadd.s32 %s154, 1
      %s156 = scalar_select %p153, %s154, %s155
      %p159 = pneg %p153
      %p160 = scmp.eq.s32.totalorder %s28, 1
      %p161 = por %p159, %p160
      %p162 = scmp.ne.s32.totalorder %s154, %s157
      %p163 = scmp.eq.s32.totalorder %s28, 0
      %p164 = por %p162, %p163
      %p165 = scmp.ne.s32.totalorder %s154, %s157
      %p166 = scmp.eq.s32.totalorder %s33, 1
      %p167 = por %p165, %p166
      %p168 = scmp.ne.s32.totalorder %s157, %s158
      %p169 = scmp.eq.s32.totalorder %s33, 0
      %p170 = por %p168, %p169
      %p171 = scmp.ne.s32.totalorder %s157, %s158
      %p172 = scmp.eq.s32.totalorder %s34, 1
      %p173 = por %p171, %p172
      %p175 = scmp.ne.s32.totalorder %s158, %s174
      %p176 = scmp.eq.s32.totalorder %s34, 0
      %p177 = por %p175, %p176
      %s178 = ssub.s32 %s36, %s43
      %p179 = scmp.eq.s32.totalorder %s178, 0
      %s181 = sadd.s32 %s180, 1
      %s182 = scalar_select %p179, %s180, %s181
      %p185 = pneg %p179
      %p186 = scmp.eq.s32.totalorder %s28, 1
      %p187 = por %p185, %p186
      %p188 = scmp.ne.s32.totalorder %s180, %s183
      %p189 = scmp.eq.s32.totalorder %s28, 0
      %p190 = por %p188, %p189
      %p191 = scmp.ne.s32.totalorder %s180, %s183
      %p192 = scmp.eq.s32.totalorder %s33, 1
      %p193 = por %p191, %p192
      %p194 = scmp.ne.s32.totalorder %s183, %s184
      %p195 = scmp.eq.s32.totalorder %s33, 0
      %p196 = por %p194, %p195
      %p197 = scmp.ne.s32.totalorder %s183, %s184
      %p198 = scmp.eq.s32.totalorder %s34, 1
      %p199 = por %p197, %p198
      %p201 = scmp.ne.s32.totalorder %s184, %s200
      %p202 = scmp.eq.s32.totalorder %s34, 0
      %p203 = por %p201, %p202
      %s204 = ssub.s32 %s36, %s43
      %p205 = scmp.eq.s32.totalorder %s204, 0
      %s207 = sadd.s32 %s206, 1
      %s208 = scalar_select %p205, %s206, %s207
      %p211 = pneg %p205
      %p212 = scmp.eq.s32.totalorder %s28, 1
      %p213 = por %p211, %p212
      %p214 = scmp.ne.s32.totalorder %s206, %s209
      %p215 = scmp.eq.s32.totalorder %s28, 0
      %p216 = por %p214, %p215
      %p217 = scmp.ne.s32.totalorder %s206, %s209
      %p218 = scmp.eq.s32.totalorder %s33, 1
      %p219 = por %p217, %p218
      %p220 = scmp.ne.s32.totalorder %s209, %s210
      %p221 = scmp.eq.s32.totalorder %s33, 0
      %p222 = por %p220, %p221
      %p223 = scmp.ne.s32.totalorder %s209, %s210
      %p224 = scmp.eq.s32.totalorder %s34, 1
      %p225 = por %p223, %p224
      %p227 = scmp.ne.s32.totalorder %s210, %s226
      %p228 = scmp.eq.s32.totalorder %s34, 0
      %p229 = por %p227, %p228
      %s230 = ssub.s32 %s36, %s43
      %p231 = scmp.eq.s32.totalorder %s230, 0
      %s233 = sadd.s32 %s232, 1
      %s234 = scalar_select %p231, %s232, %s233
      %p237 = pneg %p231
      %p238 = scmp.eq.s32.totalorder %s28, 1
      %p239 = por %p237, %p238
      %p240 = scmp.ne.s32.totalorder %s232, %s235
      %p241 = scmp.eq.s32.totalorder %s28, 0
      %p242 = por %p240, %p241
      %p243 = scmp.ne.s32.totalorder %s232, %s235
      %p244 = scmp.eq.s32.totalorder %s33, 1
      %p245 = por %p243, %p244
      %p246 = scmp.ne.s32.totalorder %s235, %s236
      %p247 = scmp.eq.s32.totalorder %s33, 0
      %p248 = por %p246, %p247
      %p249 = scmp.ne.s32.totalorder %s235, %s236
      %p250 = scmp.eq.s32.totalorder %s34, 1
      %p251 = por %p249, %p250
      %p253 = scmp.ne.s32.totalorder %s236, %s252
      %p254 = scmp.eq.s32.totalorder %s34, 0
      %p255 = por %p253, %p254
      %s256 = ssub.s32 %s36, %s43
      %p257 = scmp.eq.s32.totalorder %s256, 0
      %s259 = sadd.s32 %s258, 1
      %s260 = scalar_select %p257, %s258, %s259
      %p263 = pneg %p257
      %p264 = scmp.eq.s32.totalorder %s28, 1
      %p265 = por %p263, %p264
      %p266 = scmp.ne.s32.totalorder %s258, %s261
      %p267 = scmp.eq.s32.totalorder %s28, 0
      %p268 = por %p266, %p267
      %p269 = scmp.ne.s32.totalorder %s258, %s261
      %p270 = scmp.eq.s32.totalorder %s33, 1
      %p271 = por %p269, %p270
      %p272 = scmp.ne.s32.totalorder %s261, %s262
      %p273 = scmp.eq.s32.totalorder %s33, 0
      %p274 = por %p272, %p273
      %p275 = scmp.ne.s32.totalorder %s261, %s262
      %p276 = scmp.eq.s32.totalorder %s34, 1
      %p277 = por %p275, %p276
      %p279 = scmp.ne.s32.totalorder %s262, %s278
      %p280 = scmp.eq.s32.totalorder %s34, 0
      %p281 = por %p279, %p280
      %s282 = ssub.s32 %s36, %s43
      %p283 = scmp.eq.s32.totalorder %s282, 0
      %s285 = sadd.s32 %s284, 1
      %s286 = scalar_select %p283, %s284, %s285
      %p289 = pneg %p283
      %p290 = scmp.eq.s32.totalorder %s28, 1
      %p291 = por %p289, %p290
      %p292 = scmp.ne.s32.totalorder %s284, %s287
      %p293 = scmp.eq.s32.totalorder %s28, 0
      %p294 = por %p292, %p293
      %p295 = scmp.ne.s32.totalorder %s284, %s287
      %p296 = scmp.eq.s32.totalorder %s33, 1
      %p297 = por %p295, %p296
      %p298 = scmp.ne.s32.totalorder %s287, %s288
      %p299 = scmp.eq.s32.totalorder %s33, 0
      %p300 = por %p298, %p299
      %p301 = scmp.ne.s32.totalorder %s287, %s288
      %p302 = scmp.eq.s32.totalorder %s34, 1
      %p303 = por %p301, %p302
      %p305 = scmp.ne.s32.totalorder %s288, %s304
      %p306 = scmp.eq.s32.totalorder %s34, 0
      %p307 = por %p305, %p306
      %s308 = ssub.s32 %s36, %s43
      %p309 = scmp.eq.s32.totalorder %s308, 0
      %s311 = sadd.s32 %s310, 1
      %s312 = scalar_select %p309, %s310, %s311
      %p315 = pneg %p309
      %p316 = scmp.eq.s32.totalorder %s28, 1
      %p317 = por %p315, %p316
      %p318 = scmp.ne.s32.totalorder %s310, %s313
      %p319 = scmp.eq.s32.totalorder %s28, 0
      %p320 = por %p318, %p319
      %p321 = scmp.ne.s32.totalorder %s310, %s313
      %p322 = scmp.eq.s32.totalorder %s33, 1
      %p323 = por %p321, %p322
      %p324 = scmp.ne.s32.totalorder %s313, %s314
      %p325 = scmp.eq.s32.totalorder %s33, 0
      %p326 = por %p324, %p325
      %p327 = scmp.ne.s32.totalorder %s313, %s314
      %p328 = scmp.eq.s32.totalorder %s34, 1
      %p329 = por %p327, %p328
      %p331 = scmp.ne.s32.totalorder %s314, %s330
      %p332 = scmp.eq.s32.totalorder %s34, 0
      %p333 = por %p331, %p332
      %s334 = ssub.s32 %s36, %s43
      %p335 = scmp.eq.s32.totalorder %s334, 0
      %s337 = sadd.s32 %s336, 1
      %s338 = scalar_select %p335, %s336, %s337
      %p341 = pneg %p335
      %p342 = scmp.eq.s32.totalorder %s28, 1
      %p343 = por %p341, %p342
      %p344 = scmp.ne.s32.totalorder %s336, %s339
      %p345 = scmp.eq.s32.totalorder %s28, 0
      %p346 = por %p344, %p345
      %p347 = scmp.ne.s32.totalorder %s336, %s339
      %p348 = scmp.eq.s32.totalorder %s33, 1
      %p349 = por %p347, %p348
      %p350 = scmp.ne.s32.totalorder %s339, %s340
      %p351 = scmp.eq.s32.totalorder %s33, 0
      %p352 = por %p350, %p351
      %p353 = scmp.ne.s32.totalorder %s339, %s340
      %p354 = scmp.eq.s32.totalorder %s34, 1
      %p355 = por %p353, %p354
      %p357 = scmp.ne.s32.totalorder %s340, %s356
      %p358 = scmp.eq.s32.totalorder %s34, 0
      %p359 = por %p357, %p358
      %s360 = ssub.s32 %s36, %s43
      %p361 = scmp.eq.s32.totalorder %s360, 0
      %s363 = sadd.s32 %s362, 1
      %s364 = scalar_select %p361, %s362, %s363
      %p367 = pneg %p361
      %p368 = scmp.eq.s32.totalorder %s28, 1
      %p369 = por %p367, %p368
      %p370 = scmp.ne.s32.totalorder %s362, %s365
      %p371 = scmp.eq.s32.totalorder %s28, 0
      %p372 = por %p370, %p371
      %p373 = scmp.ne.s32.totalorder %s362, %s365
      %p374 = scmp.eq.s32.totalorder %s33, 1
      %p375 = por %p373, %p374
      %p376 = scmp.ne.s32.totalorder %s365, %s366
      %p377 = scmp.eq.s32.totalorder %s33, 0
      %p378 = por %p376, %p377
      %p379 = scmp.ne.s32.totalorder %s365, %s366
      %p380 = scmp.eq.s32.totalorder %s34, 1
      %p381 = por %p379, %p380
      %p383 = scmp.ne.s32.totalorder %s366, %s382
      %p384 = scmp.eq.s32.totalorder %s34, 0
      %p385 = por %p383, %p384
      %s386 = ssub.s32 %s36, %s43
      %p387 = scmp.eq.s32.totalorder %s386, 0
      %s389 = sadd.s32 %s388, 1
      %s390 = scalar_select %p387, %s388, %s389
      %p393 = pneg %p387
      %p394 = scmp.eq.s32.totalorder %s28, 1
      %p395 = por %p393, %p394
      %p396 = scmp.ne.s32.totalorder %s388, %s391
      %p397 = scmp.eq.s32.totalorder %s28, 0
      %p398 = por %p396, %p397
      %p399 = scmp.ne.s32.totalorder %s388, %s391
      %p400 = scmp.eq.s32.totalorder %s33, 1
      %p401 = por %p399, %p400
      %p402 = scmp.ne.s32.totalorder %s391, %s392
      %p403 = scmp.eq.s32.totalorder %s33, 0
      %p404 = por %p402, %p403
      %p405 = scmp.ne.s32.totalorder %s391, %s392
      %p406 = scmp.eq.s32.totalorder %s34, 1
      %p407 = por %p405, %p406
      %p409 = scmp.ne.s32.totalorder %s392, %s408
      %p410 = scmp.eq.s32.totalorder %s34, 0
      %p411 = por %p409, %p410
      %s412 = ssub.s32 %s35, %s47
      %p413 = scmp.eq.s32.totalorder %s412, 0
      %s415 = sadd.s32 %s414, 1
      %s416 = scalar_select %p413, %s414, %s415
      %p419 = pneg %p413
      %p420 = scmp.eq.s32.totalorder %s28, 1
      %p421 = por %p419, %p420
      %p422 = scmp.ne.s32.totalorder %s414, %s417
      %p423 = scmp.eq.s32.totalorder %s28, 0
      %p424 = por %p422, %p423
      %p425 = scmp.ne.s32.totalorder %s414, %s417
      %p426 = scmp.eq.s32.totalorder %s33, 1
      %p427 = por %p425, %p426
      %p428 = scmp.ne.s32.totalorder %s417, %s418
      %p429 = scmp.eq.s32.totalorder %s33, 0
      %p430 = por %p428, %p429
      %p431 = scmp.ne.s32.totalorder %s417, %s418
      %p432 = scmp.eq.s32.totalorder %s34, 1
      %p433 = por %p431, %p432
      %p435 = scmp.ne.s32.totalorder %s418, %s434
      %p436 = scmp.eq.s32.totalorder %s34, 0
      %p437 = por %p435, %p436
      %p438 = scmp.le.s32.totalorder 1, %s28
      %p439 = scmp.lt.s32.totalorder %s28, 3
      %p440 = pnand %p438, %p439
      %p441 = pneg %p440
      // Predicated region
      $region9: #{tpu_custom_call.1} parent=5 // pred_check
        _
      $region10: #{tpu_custom_call.1} parent=5 // pred_check_branch
        %443 = sbr.rel (%p440) target = $region12
      $region11: #{tpu_custom_call.1} parent=5 // pred_region
        %s444 = ssub.s32 %s28, 1
        // Predicated region
        $region13: #{tpu_custom_call.1} parent=11 // pred_check
          %p445 = pneg %p66
        $region14: #{tpu_custom_call.1} parent=11 // pred_check_branch
          %447 = sbr.rel (%p445) target = $region16
        $region15: #{tpu_custom_call.1} parent=11 // pred_region
          %s448 = smul.u32 2, %s37
          %s450 = ssub.s32 256, 256
          %451 = vsyncadd [#allocation4], %s450
          %s452 = smul.addr %s448, 128
          %s453 = scalar_lea.hbm %s0, %s452
          %s454 = sshll.u32 [#allocation3], 4
          %s455 = int_to_ptr.vmem [resolvable:$true] %s454
          %460 = dma.hbm_to_vmem [thread:$0]  %s453, 256, %s455, [#allocation4], 128, 128, 8
        $region16: #{tpu_custom_call.1} parent=11 // pred_fallthru
          _
        // Predicated region
        $region17: #{tpu_custom_call.1} parent=11 // pred_check
          %p461 = pneg %p92
        $region18: #{tpu_custom_call.1} parent=11 // pred_check_branch
          %463 = sbr.rel (%p461) target = $region20
        $region19: #{tpu_custom_call.1} parent=11 // pred_region
          %s464 = smul.u32 2, %s37
          %p465 = scmp.lt.s32.totalorder %s464, 1
          %s466 = scalar_select %p465, %s464, 1
          %s467 = scalar_lea.vmem %s1, %s466
          %s468 = smul.u32 2, %s37
        $region20: #{tpu_custom_call.1} parent=11 // pred_fallthru
          _
      $region12: #{tpu_custom_call.1} parent=5 // pred_fallthru
        _
      %p469 = scmp.lt.s32.totalorder %s28, 2
      // Predicated region
      $region21: #{tpu_custom_call.1} parent=5 // pred_check
        %p470 = pneg %p469
      $region22: #{tpu_custom_call.1} parent=5 // pred_check_branch
        %472 = sbr.rel (%p470) target = $region24
      $region23: #{tpu_custom_call.1} parent=5 // pred_region
        // Predicated region
        $region25: #{tpu_custom_call.1} parent=23 // pred_check
          %p473 = pneg %p112
        $region26: #{tpu_custom_call.1} parent=23 // pred_check_branch
          %475 = sbr.rel (%p473) target = $region28
        $region27: #{tpu_custom_call.1} parent=23 // pred_region
          %p476 = scmp.lt.s32.totalorder %s36, 1
          %s477 = scalar_select %p476, %s36, 1
          %s478 = smul.addr %s477, 4
          %s479 = smul.addr %s478, 4
          %s480 = scalar_lea.vmem %s2, %s479
        $region28: #{tpu_custom_call.1} parent=23 // pred_fallthru
          _
        // Predicated region
        $region29: #{tpu_custom_call.1} parent=23 // pred_check
          %p481 = pneg %p138
        $region30: #{tpu_custom_call.1} parent=23 // pred_check_branch
          %483 = sbr.rel (%p481) target = $region32
        $region31: #{tpu_custom_call.1} parent=23 // pred_region
          %p484 = scmp.lt.s32.totalorder %s36, 1
          %s485 = scalar_select %p484, %s36, 1
          %s486 = scalar_lea.vmem %s3, %s485
        $region32: #{tpu_custom_call.1} parent=23 // pred_fallthru
          _
        // Predicated region
        $region33: #{tpu_custom_call.1} parent=23 // pred_check
          %p487 = pneg %p164
        $region34: #{tpu_custom_call.1} parent=23 // pred_check_branch
          %489 = sbr.rel (%p487) target = $region36
        $region35: #{tpu_custom_call.1} parent=23 // pred_region
          %p490 = scmp.lt.s32.totalorder %s36, 1
          %s491 = scalar_select %p490, %s36, 1
          %s492 = smul.addr %s491, 4
          %s493 = smul.addr %s492, 4
          %s494 = scalar_lea.vmem %s4, %s493
        $region36: #{tpu_custom_call.1} parent=23 // pred_fallthru
          _
        // Predicated region
        $region37: #{tpu_custom_call.1} parent=23 // pred_check
          %p495 = pneg %p190
        $region38: #{tpu_custom_call.1} parent=23 // pred_check_branch
          %497 = sbr.rel (%p495) target = $region40
        $region39: #{tpu_custom_call.1} parent=23 // pred_region
          %s498 = sand.u32 %s28, 1
          %s499 = scalar_lea.sflag [#allocation7], %s498
          %s500 = sand.u32 %s180, 1
          %s501 = scalar_lea.vmem [#allocation6], %s500
          %s503 = ssub.s32 16, 16
          %504 = vsyncadd %s499, %s503
          %s505 = smul.addr %s36, 16
          %s506 = scalar_lea.hbm %s5, %s505
          %s508 = sshll.u32 %s501, 4
          %s509 = int_to_ptr.vmem [resolvable:$true] %s508
          %511 = dma.hbm_to_vmem [thread:$0]  %s506, 16, %s509, %s499
        $region40: #{tpu_custom_call.1} parent=23 // pred_fallthru
          _
        // Predicated region
        $region41: #{tpu_custom_call.1} parent=23 // pred_check
          %p512 = pneg %p216
        $region42: #{tpu_custom_call.1} parent=23 // pred_check_branch
          %514 = sbr.rel (%p512) target = $region44
        $region43: #{tpu_custom_call.1} parent=23 // pred_region
          %s515 = sand.u32 %s28, 1
          %s516 = scalar_lea.sflag [#allocation7], %s515
          %s517 = sand.u32 %s206, 1
          %s518 = scalar_lea.vmem [#allocation8], %s517
          %s520 = ssub.s32 16, 16
          %521 = vsyncadd %s516, %s520
          %s522 = smul.addr %s36, 16
          %s523 = scalar_lea.hbm %s6, %s522
          %s525 = sshll.u32 %s518, 4
          %s526 = int_to_ptr.vmem [resolvable:$true] %s525
          %528 = dma.hbm_to_vmem [thread:$0]  %s523, 16, %s526, %s516
        $region44: #{tpu_custom_call.1} parent=23 // pred_fallthru
          _
        // Predicated region
        $region45: #{tpu_custom_call.1} parent=23 // pred_check
          %p529 = pneg %p242
        $region46: #{tpu_custom_call.1} parent=23 // pred_check_branch
          %531 = sbr.rel (%p529) target = $region48
        $region47: #{tpu_custom_call.1} parent=23 // pred_region
          %s532 = sand.u32 %s28, 1
          %s533 = scalar_lea.sflag [#allocation10], %s532
          %s534 = sand.u32 %s232, 1
          %s535 = scalar_lea.vmem [#allocation9], %s534
          %s537 = ssub.s32 16, 16
          %538 = vsyncadd %s533, %s537
          %s539 = smul.addr %s36, 16
          %s540 = scalar_lea.hbm %s7, %s539
          %s542 = sshll.u32 %s535, 4
          %s543 = int_to_ptr.vmem [resolvable:$true] %s542
          %545 = dma.hbm_to_vmem [thread:$0]  %s540, 16, %s543, %s533
        $region48: #{tpu_custom_call.1} parent=23 // pred_fallthru
          _
        // Predicated region
        $region49: #{tpu_custom_call.1} parent=23 // pred_check
          %p546 = pneg %p268
        $region50: #{tpu_custom_call.1} parent=23 // pred_check_branch
          %548 = sbr.rel (%p546) target = $region52
        $region51: #{tpu_custom_call.1} parent=23 // pred_region
          %p549 = scmp.lt.s32.totalorder %s36, 1
          %s550 = scalar_select %p549, %s36, 1
          %s551 = smul.addr %s550, 4
          %s552 = smul.addr %s551, 4
          %s553 = scalar_lea.vmem %s8, %s552
        $region52: #{tpu_custom_call.1} parent=23 // pred_fallthru
          _
        // Predicated region
        $region53: #{tpu_custom_call.1} parent=23 // pred_check
          %p554 = pneg %p294
        $region54: #{tpu_custom_call.1} parent=23 // pred_check_branch
          %556 = sbr.rel (%p554) target = $region56
        $region55: #{tpu_custom_call.1} parent=23 // pred_region
          %s557 = sand.u32 %s28, 1
          %s558 = scalar_lea.sflag [#allocation10], %s557
          %s559 = sand.u32 %s284, 1
          %s560 = scalar_lea.vmem [#allocation11], %s559
          %s562 = ssub.s32 16, 16
          %563 = vsyncadd %s558, %s562
          %s564 = smul.addr %s36, 16
          %s565 = scalar_lea.hbm %s9, %s564
          %s567 = sshll.u32 %s560, 4
          %s568 = int_to_ptr.vmem [resolvable:$true] %s567
          %570 = dma.hbm_to_vmem [thread:$0]  %s565, 16, %s568, %s558
        $region56: #{tpu_custom_call.1} parent=23 // pred_fallthru
          _
        // Predicated region
        $region57: #{tpu_custom_call.1} parent=23 // pred_check
          %p571 = pneg %p320
        $region58: #{tpu_custom_call.1} parent=23 // pred_check_branch
          %573 = sbr.rel (%p571) target = $region60
        $region59: #{tpu_custom_call.1} parent=23 // pred_region
          %p574 = scmp.lt.s32.totalorder %s36, 1
          %s575 = scalar_select %p574, %s36, 1
          %s576 = smul.addr %s575, 8
          %s577 = smul.addr %s576, 4
          %s578 = scalar_lea.vmem %s10, %s577
        $region60: #{tpu_custom_call.1} parent=23 // pred_fallthru
          _
        // Predicated region
        $region61: #{tpu_custom_call.1} parent=23 // pred_check
          %p579 = pneg %p346
        $region62: #{tpu_custom_call.1} parent=23 // pred_check_branch
          %581 = sbr.rel (%p579) target = $region64
        $region63: #{tpu_custom_call.1} parent=23 // pred_region
          %p582 = scmp.lt.s32.totalorder %s36, 1
          %s583 = scalar_select %p582, %s36, 1
          %s584 = scalar_lea.vmem %s11, %s583
        $region64: #{tpu_custom_call.1} parent=23 // pred_fallthru
          _
        // Predicated region
        $region65: #{tpu_custom_call.1} parent=23 // pred_check
          %p585 = pneg %p372
        $region66: #{tpu_custom_call.1} parent=23 // pred_check_branch
          %587 = sbr.rel (%p585) target = $region68
        $region67: #{tpu_custom_call.1} parent=23 // pred_region
          %p588 = scmp.lt.s32.totalorder %s36, 1
          %s589 = scalar_select %p588, %s36, 1
          %s590 = scalar_lea.vmem %s12, %s589
        $region68: #{tpu_custom_call.1} parent=23 // pred_fallthru
          _
        // Predicated region
        $region69: #{tpu_custom_call.1} parent=23 // pred_check
          %p591 = pneg %p398
        $region70: #{tpu_custom_call.1} parent=23 // pred_check_branch
          %593 = sbr.rel (%p591) target = $region72
        $region71: #{tpu_custom_call.1} parent=23 // pred_region
          %p594 = scmp.lt.s32.totalorder %s36, 1
          %s595 = scalar_select %p594, %s36, 1
          %s596 = scalar_lea.vmem %s13, %s595
        $region72: #{tpu_custom_call.1} parent=23 // pred_fallthru
          _
      $region24: #{tpu_custom_call.1} parent=5 // pred_fallthru
        _
      %p597 = scmp.le.s32.totalorder 1, %s28
      %p598 = scmp.lt.s32.totalorder %s28, 3
      %p599 = pnand %p597, %p598
      %p600 = pneg %p599
      // Predicated region
      $region73: #{tpu_custom_call.1} parent=5 // pred_check
        _
      $region74: #{tpu_custom_call.1} parent=5 // pred_check_branch
        %602 = sbr.rel (%p599) target = $region76
      $region75: #{tpu_custom_call.1} parent=5 // pred_region
        %s603 = ssub.s32 %s28, 1
        // Predicated region
        $region77: #{tpu_custom_call.1} parent=75 // pred_check
          %p604 = pneg %p66
        $region78: #{tpu_custom_call.1} parent=75 // pred_check_branch
          %606 = sbr.rel (%p604) target = $region80
        $region79: #{tpu_custom_call.1} parent=75 // pred_region
          %607 = dma.done [#allocation4], 256
        $region80: #{tpu_custom_call.1} parent=75 // pred_fallthru
          _
        %s608 = sand.u32 %s33, 1
        %s609 = scalar_lea.sflag [#allocation7], %s608
        %s610 = sand.u32 %s183, 1
        %s611 = scalar_lea.vmem [#allocation6], %s610
        // Predicated region
        $region81: #{tpu_custom_call.1} parent=75 // pred_check
          %p612 = pneg %p196
        $region82: #{tpu_custom_call.1} parent=75 // pred_check_branch
          %614 = sbr.rel (%p612) target = $region84
        $region83: #{tpu_custom_call.1} parent=75 // pred_region
          %615 = dma.done %s609, 16
        $region84: #{tpu_custom_call.1} parent=75 // pred_fallthru
          _
        %s616 = sand.u32 %s33, 1
        %s617 = scalar_lea.sflag [#allocation7], %s616
        %s618 = sand.u32 %s209, 1
        %s619 = scalar_lea.vmem [#allocation8], %s618
        // Predicated region
        $region85: #{tpu_custom_call.1} parent=75 // pred_check
          %p620 = pneg %p222
        $region86: #{tpu_custom_call.1} parent=75 // pred_check_branch
          %622 = sbr.rel (%p620) target = $region88
        $region87: #{tpu_custom_call.1} parent=75 // pred_region
          %623 = dma.done %s617, 16
        $region88: #{tpu_custom_call.1} parent=75 // pred_fallthru
          _
        %s624 = sand.u32 %s33, 1
        %s625 = scalar_lea.sflag [#allocation10], %s624
        %s626 = sand.u32 %s235, 1
        %s627 = scalar_lea.vmem [#allocation9], %s626
        // Predicated region
        $region89: #{tpu_custom_call.1} parent=75 // pred_check
          %p628 = pneg %p248
        $region90: #{tpu_custom_call.1} parent=75 // pred_check_branch
          %630 = sbr.rel (%p628) target = $region92
        $region91: #{tpu_custom_call.1} parent=75 // pred_region
          %631 = dma.done %s625, 16
        $region92: #{tpu_custom_call.1} parent=75 // pred_fallthru
          _
        %s632 = sand.u32 %s33, 1
        %s633 = scalar_lea.sflag [#allocation10], %s632
        %s634 = sand.u32 %s287, 1
        %s635 = scalar_lea.vmem [#allocation11], %s634
        // Predicated region
        $region93: #{tpu_custom_call.1} parent=75 // pred_check
          %p636 = pneg %p300
        $region94: #{tpu_custom_call.1} parent=75 // pred_check_branch
          %638 = sbr.rel (%p636) target = $region96
        $region95: #{tpu_custom_call.1} parent=75 // pred_region
          %639 = dma.done %s633, 16
        $region96: #{tpu_custom_call.1} parent=75 // pred_fallthru
          _
        %p640 = pneg %p66
        %p641 = pneg %p63
        %s642 = smul.u32 2, %s37
        %p643 = scmp.lt.s32.totalorder %s642, 1
        %s644 = scalar_select %p643, %s642, 1
        %s645 = scalar_lea.vmem %s1, %s644
        %p646 = pneg %p92
        %p647 = pneg %p89
        %p648 = scmp.lt.s32.totalorder %s38, 1
        %s649 = scalar_select %p648, %s38, 1
        %s650 = smul.addr %s649, 4
        %s651 = smul.addr %s650, 4
        %s652 = scalar_lea.vmem %s2, %s651
        %p653 = pneg %p118
        %p654 = pneg %p115
        %p655 = scmp.lt.s32.totalorder %s38, 1
        %s656 = scalar_select %p655, %s38, 1
        %s657 = scalar_lea.vmem %s3, %s656
        %p658 = pneg %p144
        %p659 = pneg %p141
        %p660 = scmp.lt.s32.totalorder %s38, 1
        %s661 = scalar_select %p660, %s38, 1
        %s662 = smul.addr %s661, 4
        %s663 = smul.addr %s662, 4
        %s664 = scalar_lea.vmem %s4, %s663
        %p665 = pneg %p170
        %p666 = pneg %p167
        %s667 = sand.u32 %s33, 1
        %s668 = scalar_lea.sflag [#allocation7], %s667
        %s669 = sand.u32 %s183, 1
        %s670 = scalar_lea.vmem [#allocation6], %s669
        %p671 = pneg %p196
        %p672 = pneg %p193
        %s673 = sand.u32 %s33, 1
        %s674 = scalar_lea.sflag [#allocation7], %s673
        %s675 = sand.u32 %s209, 1
        %s676 = scalar_lea.vmem [#allocation8], %s675
        %p677 = pneg %p222
        %p678 = pneg %p219
        %s679 = sand.u32 %s33, 1
        %s680 = scalar_lea.sflag [#allocation10], %s679
        %s681 = sand.u32 %s235, 1
        %s682 = scalar_lea.vmem [#allocation9], %s681
        %p683 = pneg %p248
        %p684 = pneg %p245
        %p685 = scmp.lt.s32.totalorder %s38, 1
        %s686 = scalar_select %p685, %s38, 1
        %s687 = smul.addr %s686, 4
        %s688 = smul.addr %s687, 4
        %s689 = scalar_lea.vmem %s8, %s688
        %p690 = pneg %p274
        %p691 = pneg %p271
        %s692 = sand.u32 %s33, 1
        %s693 = scalar_lea.sflag [#allocation10], %s692
        %s694 = sand.u32 %s287, 1
        %s695 = scalar_lea.vmem [#allocation11], %s694
        %p696 = pneg %p300
        %p697 = pneg %p297
        %p698 = scmp.lt.s32.totalorder %s38, 1
        %s699 = scalar_select %p698, %s38, 1
        %s700 = smul.addr %s699, 8
        %s701 = smul.addr %s700, 4
        %s702 = scalar_lea.vmem %s10, %s701
        %p703 = pneg %p326
        %p704 = pneg %p323
        %p705 = scmp.lt.s32.totalorder %s38, 1
        %s706 = scalar_select %p705, %s38, 1
        %s707 = scalar_lea.vmem %s11, %s706
        %p708 = pneg %p352
        %p709 = pneg %p349
        %p710 = scmp.lt.s32.totalorder %s38, 1
        %s711 = scalar_select %p710, %s38, 1
        %s712 = scalar_lea.vmem %s12, %s711
        %p713 = pneg %p378
        %p714 = pneg %p375
        %p715 = scmp.lt.s32.totalorder %s38, 1
        %s716 = scalar_select %p715, %s38, 1
        %s717 = scalar_lea.vmem %s13, %s716
        %p718 = pneg %p404
        %p719 = pneg %p401
        %p720 = pneg %p430
        %p721 = pneg %p427
        %s722 = smul.u32 2, %s37
        %s723 = smul.u32 2, %s37
        %p724 = scmp.lt.s32.totalorder %s723, 1
        %s725 = scalar_select %p724, %s723, 1
        %s726 = scalar_lea.vmem %s1, %s725
        %s727 = smul.u32 2, %s37
        %p728 = scmp.lt.s32.totalorder %s38, 1
        %s729 = scalar_select %p728, %s38, 1
        %s730 = smul.addr %s729, 4
        %s731 = smul.addr %s730, 4
        %s732 = scalar_lea.vmem %s2, %s731
        %p733 = scmp.lt.s32.totalorder %s38, 1
        %s734 = scalar_select %p733, %s38, 1
        %s735 = scalar_lea.vmem %s3, %s734
        %p736 = scmp.lt.s32.totalorder %s38, 1
        %s737 = scalar_select %p736, %s38, 1
        %s738 = smul.addr %s737, 4
        %s739 = smul.addr %s738, 4
        %s740 = scalar_lea.vmem %s4, %s739
        %p741 = scmp.lt.s32.totalorder %s38, 1
        %s742 = scalar_select %p741, %s38, 1
        %s743 = smul.addr %s742, 4
        %s744 = smul.addr %s743, 4
        %s745 = scalar_lea.vmem %s8, %s744
        %p746 = scmp.lt.s32.totalorder %s38, 1
        %s747 = scalar_select %p746, %s38, 1
        %s748 = smul.addr %s747, 8
        %s749 = smul.addr %s748, 4
        %s750 = scalar_lea.vmem %s10, %s749
        %p751 = scmp.lt.s32.totalorder %s38, 1
        %s752 = scalar_select %p751, %s38, 1
        %s753 = scalar_lea.vmem %s11, %s752
        %p754 = scmp.lt.s32.totalorder %s38, 1
        %s755 = scalar_select %p754, %s38, 1
        %s756 = scalar_lea.vmem %s12, %s755
        %p757 = scmp.lt.s32.totalorder %s38, 1
        %s758 = scalar_select %p757, %s38, 1
        %s759 = scalar_lea.vmem %s13, %s758
        %s760 = smul.u32 2, %s37
        %p762 = scmp.eq.s32.totalorder %s38, 0
        // Predicated region
        $region97: #{tpu_custom_call.1} parent=75 // pred_check
          %p763 = pneg %p762
        $region98: #{tpu_custom_call.1} parent=75 // pred_check_branch
          %765 = sbr.rel (%p763) target = $region100
        $region99: #{tpu_custom_call.1} parent=75 // pred_region
          %v766 = vld [vmem:[#allocation3] sm:$0xff]
          %v767 = vld [vmem:[#allocation3 + $0x8] sm:$0xff]
          %vm768 = vcmask 261120
          %769 = vst.msk [vmem:[#allocation12] sm:$0xff] %vm768, %v766
          %770 = vst.msk [vmem:[#allocation12 + $0x8] sm:$0xff] %vm768, %v767
        $region100: #{tpu_custom_call.1} parent=75 // pred_fallthru
          _
        %v771 = vld [vmem:[#allocation12] sm:$0xff]
        %v772 = vld [vmem:[#allocation12 + $0x8] sm:$0xff]
        %v773 = vld [vmem:[%s726] sm:$0x1]
        %v774 = vld [vmem:[%s726 + $0x1] sm:$0x1]
        %v777 = vlaneseq
        %v778 = vshrl.u32 %v777, 7
        %v779 = vsub.s32 0, %v778
        %v780 = vrot.slane %v773, %v779
        %v781 = vlaneseq
        %v782 = vshrl.u32 %v781, 7
        %v783 = vsub.s32 0, %v782
        %v784 = vrot.slane %v774, %v783
        %v787 = vpack.c.bf16 %v772, %v771
        %v788 = vld [vmem:[%s732] sm:$0xf]
        %v789 = vld [vmem:[%s732 + $0x4] sm:$0xf]
        %v790 = vld [vmem:[%s732 + $0x8] sm:$0xf]
        %v791 = vld [vmem:[%s732 + $0xc] sm:$0xf]
        %v792 = vld [vmem:[%s735] sm:$0x1]
        %v794 = vlaneseq
        %v795 = vshrl.u32 %v794, 7
        %v796 = vsub.s32 0, %v795
        %v797 = vrot.slane %v792, %v796
        %v803 = vunpack.c.l.b16 %v788
        %v804 = vunpack.c.l.b16 %v789
        %v805 = vunpack.c.l.b16 %v790
        %v806 = vunpack.c.l.b16 %v791
        %v807 = vpack.c.b16 %v804, %v803
        %v808 = vpack.c.b16 %v806, %v805
        %vm811 = vcmask 261120
        %v813 = vsel %vm811, %v787, 0
        %815 = vmatprep.subr.bf16.mxu0 0
        %816 = vmatpush1.bf16.msra.mxu0 %v807
        %817 = vmatprep.subr.bf16.mxu0 0
        %818 = vmatpush1.bf16.msra.mxu0 %v808
        %819 = vmatprep.subr.bf16.mxu0 0
        %820 = vmatpush1.bf16.msra.mxu0 0
        %821 = vmatprep.subr.bf16.mxu0 0
        %822 = vmatpush1.bf16.msra.mxu0 0
        %823 = vmatprep.subr.bf16.mxu0 0
        %824 = vmatpush1.bf16.msra.mxu0 0
        %825 = vmatprep.subr.bf16.mxu0 0
        %826 = vmatpush1.bf16.msra.mxu0 0
        %827 = vmatprep.subr.bf16.mxu0 0
        %828 = vmatpush1.bf16.msra.mxu0 0
        %829 = vmatprep.subr.bf16.mxu0 0
        %830 = vmatpush1.bf16.msra.mxu0 0
        %831 = vmatprep.subr.bf16.mxu0 0
        %832 = vmatpush1.bf16.msra.mxu0 0
        %833 = vmatprep.subr.bf16.mxu0 0
        %834 = vmatpush1.bf16.msra.mxu0 0
        %835 = vmatprep.subr.bf16.mxu0 0
        %836 = vmatpush1.bf16.msra.mxu0 0
        %837 = vmatprep.subr.bf16.mxu0 0
        %838 = vmatpush1.bf16.msra.mxu0 0
        %839 = vmatprep.subr.bf16.mxu0 0
        %840 = vmatpush1.bf16.msra.mxu0 0
        %841 = vmatprep.subr.bf16.mxu0 0
        %842 = vmatpush1.bf16.msra.mxu0 0
        %843 = vmatprep.subr.bf16.mxu0 0
        %844 = vmatpush1.bf16.msra.mxu0 0
        %845 = vmatprep.subr.bf16.mxu0 0
        %846 = vmatpush1.bf16.msra.mxu0 0
        %847 = vmatprep.mubr.bf16.mxu0 0
        %848 = vmatmul.mubr.bf16.gmra.mrb[0].mxu0 %v813
        %v849 = vpop.f32.mrb[0].mxu0
        %v850 = vadd.f32 %v797, %v849
        %v851 = vpop.f32.mrb[0].mxu0
        %v852 = vpop.f32.mrb[0].mxu0
        %v853 = vadd.f32 %v797, %v852
        %v854 = vpop.f32.mrb[0].mxu0
        %855 = vdwg.mxu0
        %v856 = vpack.c.bf16 %v850, %v850
        %v857 = vpack.c.bf16 %v853, %v853
        %859 = vrot.lane.b32.xlu0 %v856, 96
        %v860 = vpop.permute.xlu0 %859
        %vm861 = vcmask 64512
        %v863 = vsel %vm861, %v856, 0
        %v866 = vsel %vm861, %v860, 0
        %868 = vmatprep.subr.bf16.mxu0 0
        %869 = vmatpush1.bf16.xpose.msra.mxu0 %v866
        %870 = vmatprep.subr.bf16.mxu0 0
        %871 = vmatpush1.bf16.xpose.msra.mxu0 0
        %872 = vmatprep.subr.bf16.mxu0 0
        %873 = vmatpush1.bf16.xpose.msra.mxu0 0
        %874 = vmatprep.subr.bf16.mxu0 0
        %875 = vmatpush1.bf16.xpose.msra.mxu0 0
        %876 = vmatprep.subr.bf16.mxu0 0
        %877 = vmatpush1.bf16.xpose.msra.mxu0 0
        %878 = vmatprep.subr.bf16.mxu0 0
        %879 = vmatpush1.bf16.xpose.msra.mxu0 0
        %880 = vmatprep.subr.bf16.mxu0 0
        %881 = vmatpush1.bf16.xpose.msra.mxu0 0
        %882 = vmatprep.subr.bf16.mxu0 0
        %883 = vmatpush1.bf16.xpose.msra.mxu0 0
        %884 = vmatprep.subr.bf16.mxu0 0
        %885 = vmatpush1.bf16.xpose.msra.mxu0 0
        %886 = vmatprep.subr.bf16.mxu0 0
        %887 = vmatpush1.bf16.xpose.msra.mxu0 0
        %888 = vmatprep.subr.bf16.mxu0 0
        %889 = vmatpush1.bf16.xpose.msra.mxu0 0
        %890 = vmatprep.subr.bf16.mxu0 0
        %891 = vmatpush1.bf16.xpose.msra.mxu0 0
        %892 = vmatprep.subr.bf16.mxu0 0
        %893 = vmatpush1.bf16.xpose.msra.mxu0 0
        %894 = vmatprep.subr.bf16.mxu0 0
        %895 = vmatpush1.bf16.xpose.msra.mxu0 0
        %896 = vmatprep.subr.bf16.mxu0 0
        %897 = vmatpush1.bf16.xpose.msra.mxu0 0
        %898 = vmatprep.subr.bf16.mxu0 0
        %899 = vmatpush1.bf16.xpose.msra.mxu0 0
        %900 = vmatprep.mubr.bf16.mxu0 0
        %901 = vmatmul.mubr.bf16.gmra.mrb[0].mxu0 %v863
        %v902 = vpop.f32.mrb[0].mxu0
        %v903 = vadd.f32 %v780, %v902
        %v904 = vpop.f32.mrb[0].mxu0
        %v905 = vpop.f32.mrb[0].mxu0
        %v906 = vpop.f32.mrb[0].mxu0
        %907 = vdwg.mxu0
        %909 = vrot.lane.b32.xlu0 %v857, 96
        %v910 = vpop.permute.xlu0 %909
        %v912 = vsel %vm861, %v857, 0
        %v915 = vsel %vm861, %v910, 0
        %917 = vmatprep.subr.bf16.mxu0 0
        %918 = vmatpush1.bf16.xpose.msra.mxu0 %v915
        %919 = vmatprep.subr.bf16.mxu0 0
        %920 = vmatpush1.bf16.xpose.msra.mxu0 0
        %921 = vmatprep.subr.bf16.mxu0 0
        %922 = vmatpush1.bf16.xpose.msra.mxu0 0
        %923 = vmatprep.subr.bf16.mxu0 0
        %924 = vmatpush1.bf16.xpose.msra.mxu0 0
        %925 = vmatprep.subr.bf16.mxu0 0
        %926 = vmatpush1.bf16.xpose.msra.mxu0 0
        %927 = vmatprep.subr.bf16.mxu0 0
        %928 = vmatpush1.bf16.xpose.msra.mxu0 0
        %929 = vmatprep.subr.bf16.mxu0 0
        %930 = vmatpush1.bf16.xpose.msra.mxu0 0
        %931 = vmatprep.subr.bf16.mxu0 0
        %932 = vmatpush1.bf16.xpose.msra.mxu0 0
        %933 = vmatprep.subr.bf16.mxu0 0
        %934 = vmatpush1.bf16.xpose.msra.mxu0 0
        %935 = vmatprep.subr.bf16.mxu0 0
        %936 = vmatpush1.bf16.xpose.msra.mxu0 0
        %937 = vmatprep.subr.bf16.mxu0 0
        %938 = vmatpush1.bf16.xpose.msra.mxu0 0
        %939 = vmatprep.subr.bf16.mxu0 0
        %940 = vmatpush1.bf16.xpose.msra.mxu0 0
        %941 = vmatprep.subr.bf16.mxu0 0
        %942 = vmatpush1.bf16.xpose.msra.mxu0 0
        %943 = vmatprep.subr.bf16.mxu0 0
        %944 = vmatpush1.bf16.xpose.msra.mxu0 0
        %945 = vmatprep.subr.bf16.mxu0 0
        %946 = vmatpush1.bf16.xpose.msra.mxu0 0
        %947 = vmatprep.subr.bf16.mxu0 0
        %948 = vmatpush1.bf16.xpose.msra.mxu0 0
        %949 = vmatprep.mubr.bf16.mxu0 0
        %950 = vmatmul.mubr.bf16.gmra.mrb[0].mxu0 %v912
        %v951 = vpop.f32.mrb[0].mxu0
        %v952 = vadd.f32 %v784, %v951
        %v953 = vpop.f32.mrb[0].mxu0
        %v954 = vpop.f32.mrb[0].mxu0
        %v955 = vpop.f32.mrb[0].mxu0
        %956 = vdwg.mxu0
        %v957 = vsel %vm861, %v903, -inf
        %958 = vmax.xlane.f32.xlu0 %v957
        %v959 = vpop.xlane.xlu0 %958
        %v960 = vsel %vm861, %v952, -inf
        %961 = vmax.xlane.f32.xlu0 %v960
        %v962 = vpop.xlane.xlu0 %961
        %v963 = vsub.f32 %v903, %v959
        %v964 = vsub.f32 %v952, %v962
        %v965 = vmul.f32 %v963, 1.442695
        %v966 = vpow.pop %v965
        %v967 = vmul.f32 %v964, 1.442695
        %v968 = vpow.pop %v967
        %v969 = vsel %vm861, %v966, 0.0
        %970 = vadd.xlane.f32.xlu0 %v969
        %v971 = vpop.xlane.xlu0 %970
        %v972 = vsel %vm861, %v968, 0.0
        %973 = vadd.xlane.f32.xlu0 %v972
        %v974 = vpop.xlane.xlu0 %973
        %v975 = vrcp.pop %v971
        %v976 = vrcp.pop %v974
        %v977 = vmul.f32 %v966, %v975
        %v978 = vmul.f32 %v968, %v976
        %v979 = vpack.c.bf16 %v977, %v977
        %v980 = vpack.c.bf16 %v978, %v978
        %981 = vrot.lane.b32.xlu0 %v856, 64
        %v982 = vpop.permute.xlu0 %981
        %v984 = vsel %vm861, %v979, 0
        %vm986 = vcmask 1043456
        %v988 = vsel %vm986, %v982, 0
        %990 = vmatprep.subr.bf16.mxu0 0
        %991 = vmatpush1.bf16.msra.mxu0 %v988
        %992 = vmatprep.subr.bf16.mxu0 0
        %993 = vmatpush1.bf16.msra.mxu0 0
        %994 = vmatprep.subr.bf16.mxu0 0
        %995 = vmatpush1.bf16.msra.mxu0 0
        %996 = vmatprep.subr.bf16.mxu0 0
        %997 = vmatpush1.bf16.msra.mxu0 0
        %998 = vmatprep.subr.bf16.mxu0 0
        %999 = vmatpush1.bf16.msra.mxu0 0
        %1000 = vmatprep.subr.bf16.mxu0 0
        %1001 = vmatpush1.bf16.msra.mxu0 0
        %1002 = vmatprep.subr.bf16.mxu0 0
        %1003 = vmatpush1.bf16.msra.mxu0 0
        %1004 = vmatprep.subr.bf16.mxu0 0
        %1005 = vmatpush1.bf16.msra.mxu0 0
        %1006 = vmatprep.subr.bf16.mxu0 0
        %1007 = vmatpush1.bf16.msra.mxu0 0
        %1008 = vmatprep.subr.bf16.mxu0 0
        %1009 = vmatpush1.bf16.msra.mxu0 0
        %1010 = vmatprep.subr.bf16.mxu0 0
        %1011 = vmatpush1.bf16.msra.mxu0 0
        %1012 = vmatprep.subr.bf16.mxu0 0
        %1013 = vmatpush1.bf16.msra.mxu0 0
        %1014 = vmatprep.subr.bf16.mxu0 0
        %1015 = vmatpush1.bf16.msra.mxu0 0
        %1016 = vmatprep.subr.bf16.mxu0 0
        %1017 = vmatpush1.bf16.msra.mxu0 0
        %1018 = vmatprep.subr.bf16.mxu0 0
        %1019 = vmatpush1.bf16.msra.mxu0 0
        %1020 = vmatprep.subr.bf16.mxu0 0
        %1021 = vmatpush1.bf16.msra.mxu0 0
        %1022 = vmatprep.mubr.bf16.mxu0 0
        %1023 = vmatmul.mubr.bf16.gmra.mrb[0].mxu0 %v984
        %v1024 = vpop.f32.mrb[0].mxu0
        %v1025 = vadd.f32 0.0, %v1024
        %v1026 = vpop.f32.mrb[0].mxu0
        %v1027 = vpop.f32.mrb[0].mxu0
        %v1028 = vpop.f32.mrb[0].mxu0
        %1029 = vdwg.mxu0
        %1030 = vrot.lane.b32.xlu0 %v857, 64
        %v1031 = vpop.permute.xlu0 %1030
        %v1033 = vsel %vm861, %v980, 0
        %v1036 = vsel %vm986, %v1031, 0
        %1038 = vmatprep.subr.bf16.mxu0 0
        %1039 = vmatpush1.bf16.msra.mxu0 %v1036
        %1040 = vmatprep.subr.bf16.mxu0 0
        %1041 = vmatpush1.bf16.msra.mxu0 0
        %1042 = vmatprep.subr.bf16.mxu0 0
        %1043 = vmatpush1.bf16.msra.mxu0 0
        %1044 = vmatprep.subr.bf16.mxu0 0
        %1045 = vmatpush1.bf16.msra.mxu0 0
        %1046 = vmatprep.subr.bf16.mxu0 0
        %1047 = vmatpush1.bf16.msra.mxu0 0
        %1048 = vmatprep.subr.bf16.mxu0 0
        %1049 = vmatpush1.bf16.msra.mxu0 0
        %1050 = vmatprep.subr.bf16.mxu0 0
        %1051 = vmatpush1.bf16.msra.mxu0 0
        %1052 = vmatprep.subr.bf16.mxu0 0
        %1053 = vmatpush1.bf16.msra.mxu0 0
        %1054 = vmatprep.subr.bf16.mxu0 0
        %1055 = vmatpush1.bf16.msra.mxu0 0
        %1056 = vmatprep.subr.bf16.mxu0 0
        %1057 = vmatpush1.bf16.msra.mxu0 0
        %1058 = vmatprep.subr.bf16.mxu0 0
        %1059 = vmatpush1.bf16.msra.mxu0 0
        %1060 = vmatprep.subr.bf16.mxu0 0
        %1061 = vmatpush1.bf16.msra.mxu0 0
        %1062 = vmatprep.subr.bf16.mxu0 0
        %1063 = vmatpush1.bf16.msra.mxu0 0
        %1064 = vmatprep.subr.bf16.mxu0 0
        %1065 = vmatpush1.bf16.msra.mxu0 0
        %1066 = vmatprep.subr.bf16.mxu0 0
        %1067 = vmatpush1.bf16.msra.mxu0 0
        %1068 = vmatprep.subr.bf16.mxu0 0
        %1069 = vmatpush1.bf16.msra.mxu0 0
        %1070 = vmatprep.mubr.bf16.mxu0 0
        %1071 = vmatmul.mubr.bf16.gmra.mrb[0].mxu0 %v1033
        %v1072 = vpop.f32.mrb[0].mxu0
        %v1073 = vadd.f32 0.0, %v1072
        %v1074 = vpop.f32.mrb[0].mxu0
        %v1075 = vpop.f32.mrb[0].mxu0
        %v1076 = vpop.f32.mrb[0].mxu0
        %1077 = vdwg.mxu0
        %1078 = vst.msk [vmem:[#allocation2] sm:$0xff] %vm861, %v1025
        %1079 = vst.msk [vmem:[#allocation2 + $0x8] sm:$0xff] %vm861, %v1073
        %1080 = vrot.lane.b32.xlu0 %v856, 120
        %v1081 = vpop.permute.xlu0 %1080
        %1082 = vrot.lane.b32.xlu0 %v856, 88
        %v1083 = vpop.permute.xlu0 %1082
        %v1085 = vsel %vm861, %v1081, 0
        %v1088 = vsel %vm861, %v1083, 0
        %1090 = vmatprep.subr.bf16.mxu0 0
        %1091 = vmatpush1.bf16.xpose.msra.mxu0 %v1088
        %1092 = vmatprep.subr.bf16.mxu0 0
        %1093 = vmatpush1.bf16.xpose.msra.mxu0 0
        %1094 = vmatprep.subr.bf16.mxu0 0
        %1095 = vmatpush1.bf16.xpose.msra.mxu0 0
        %1096 = vmatprep.subr.bf16.mxu0 0
        %1097 = vmatpush1.bf16.xpose.msra.mxu0 0
        %1098 = vmatprep.subr.bf16.mxu0 0
        %1099 = vmatpush1.bf16.xpose.msra.mxu0 0
        %1100 = vmatprep.subr.bf16.mxu0 0
        %1101 = vmatpush1.bf16.xpose.msra.mxu0 0
        %1102 = vmatprep.subr.bf16.mxu0 0
        %1103 = vmatpush1.bf16.xpose.msra.mxu0 0
        %1104 = vmatprep.subr.bf16.mxu0 0
        %1105 = vmatpush1.bf16.xpose.msra.mxu0 0
        %1106 = vmatprep.subr.bf16.mxu0 0
        %1107 = vmatpush1.bf16.xpose.msra.mxu0 0
        %1108 = vmatprep.subr.bf16.mxu0 0
        %1109 = vmatpush1.bf16.xpose.msra.mxu0 0
        %1110 = vmatprep.subr.bf16.mxu0 0
        %1111 = vmatpush1.bf16.xpose.msra.mxu0 0
        %1112 = vmatprep.subr.bf16.mxu0 0
        %1113 = vmatpush1.bf16.xpose.msra.mxu0 0
        %1114 = vmatprep.subr.bf16.mxu0 0
        %1115 = vmatpush1.bf16.xpose.msra.mxu0 0
        %1116 = vmatprep.subr.bf16.mxu0 0
        %1117 = vmatpush1.bf16.xpose.msra.mxu0 0
        %1118 = vmatprep.subr.bf16.mxu0 0
        %1119 = vmatpush1.bf16.xpose.msra.mxu0 0
        %1120 = vmatprep.subr.bf16.mxu0 0
        %1121 = vmatpush1.bf16.xpose.msra.mxu0 0
        %1122 = vmatprep.mubr.bf16.mxu0 0
        %1123 = vmatmul.mubr.bf16.gmra.mrb[0].mxu0 %v1085
        %v1124 = vpop.f32.mrb[0].mxu0
        %v1125 = vadd.f32 %v780, %v1124
        %v1126 = vpop.f32.mrb[0].mxu0
        %v1127 = vpop.f32.mrb[0].mxu0
        %v1128 = vpop.f32.mrb[0].mxu0
        %1129 = vdwg.mxu0
        %1130 = vrot.lane.b32.xlu0 %v857, 120
        %v1131 = vpop.permute.xlu0 %1130
        %1132 = vrot.lane.b32.xlu0 %v857, 88
        %v1133 = vpop.permute.xlu0 %1132
        %v1135 = vsel %vm861, %v1131, 0
        %v1138 = vsel %vm861, %v1133, 0
        %1140 = vmatprep.subr.bf16.mxu0 0
        %1141 = vmatpush1.bf16.xpose.msra.mxu0 %v1138
        %1142 = vmatprep.subr.bf16.mxu0 0
        %1143 = vmatpush1.bf16.xpose.msra.mxu0 0
        %1144 = vmatprep.subr.bf16.mxu0 0
        %1145 = vmatpush1.bf16.xpose.msra.mxu0 0
        %1146 = vmatprep.subr.bf16.mxu0 0
        %1147 = vmatpush1.bf16.xpose.msra.mxu0 0
        %1148 = vmatprep.subr.bf16.mxu0 0
        %1149 = vmatpush1.bf16.xpose.msra.mxu0 0
        %1150 = vmatprep.subr.bf16.mxu0 0
        %1151 = vmatpush1.bf16.xpose.msra.mxu0 0
        %1152 = vmatprep.subr.bf16.mxu0 0
        %1153 = vmatpush1.bf16.xpose.msra.mxu0 0
        %1154 = vmatprep.subr.bf16.mxu0 0
        %1155 = vmatpush1.bf16.xpose.msra.mxu0 0
        %1156 = vmatprep.subr.bf16.mxu0 0
        %1157 = vmatpush1.bf16.xpose.msra.mxu0 0
        %1158 = vmatprep.subr.bf16.mxu0 0
        %1159 = vmatpush1.bf16.xpose.msra.mxu0 0
        %1160 = vmatprep.subr.bf16.mxu0 0
        %1161 = vmatpush1.bf16.xpose.msra.mxu0 0
        %1162 = vmatprep.subr.bf16.mxu0 0
        %1163 = vmatpush1.bf16.xpose.msra.mxu0 0
        %1164 = vmatprep.subr.bf16.mxu0 0
        %1165 = vmatpush1.bf16.xpose.msra.mxu0 0
        %1166 = vmatprep.subr.bf16.mxu0 0
        %1167 = vmatpush1.bf16.xpose.msra.mxu0 0
        %1168 = vmatprep.subr.bf16.mxu0 0
        %1169 = vmatpush1.bf16.xpose.msra.mxu0 0
        %1170 = vmatprep.subr.bf16.mxu0 0
        %1171 = vmatpush1.bf16.xpose.msra.mxu0 0
        %1172 = vmatprep.mubr.bf16.mxu0 0
        %1173 = vmatmul.mubr.bf16.gmra.mrb[0].mxu0 %v1135
        %v1174 = vpop.f32.mrb[0].mxu0
        %v1175 = vadd.f32 %v784, %v1174
        %v1176 = vpop.f32.mrb[0].mxu0
        %v1177 = vpop.f32.mrb[0].mxu0
        %v1178 = vpop.f32.mrb[0].mxu0
        %1179 = vdwg.mxu0
        %v1180 = vsel %vm861, %v1125, -inf
        %1181 = vmax.xlane.f32.xlu0 %v1180
        %v1182 = vpop.xlane.xlu0 %1181
        %v1183 = vsel %vm861, %v1175, -inf
        %1184 = vmax.xlane.f32.xlu0 %v1183
        %v1185 = vpop.xlane.xlu0 %1184
        %v1186 = vsub.f32 %v1125, %v1182
        %v1187 = vsub.f32 %v1175, %v1185
        %v1188 = vmul.f32 %v1186, 1.442695
        %v1189 = vpow.pop %v1188
        %v1190 = vmul.f32 %v1187, 1.442695
        %v1191 = vpow.pop %v1190
        %v1192 = vsel %vm861, %v1189, 0.0
        %1193 = vadd.xlane.f32.xlu0 %v1192
        %v1194 = vpop.xlane.xlu0 %1193
        %v1195 = vsel %vm861, %v1191, 0.0
        %1196 = vadd.xlane.f32.xlu0 %v1195
        %v1197 = vpop.xlane.xlu0 %1196
        %v1198 = vrcp.pop %v1194
        %v1199 = vrcp.pop %v1197
        %v1200 = vmul.f32 %v1189, %v1198
        %v1201 = vmul.f32 %v1191, %v1199
        %v1202 = vpack.c.bf16 %v1200, %v1200
        %v1203 = vpack.c.bf16 %v1201, %v1201
        %1204 = vrot.lane.b32.xlu0 %v856, 56
        %v1205 = vpop.permute.xlu0 %1204
        %v1207 = vsel %vm861, %v1202, 0
        %v1210 = vsel %vm986, %v1205, 0
        %1212 = vmatprep.subr.bf16.mxu0 0
        %1213 = vmatpush1.bf16.msra.mxu0 %v1210
        %1214 = vmatprep.subr.bf16.mxu0 0
        %1215 = vmatpush1.bf16.msra.mxu0 0
        %1216 = vmatprep.subr.bf16.mxu0 0
        %1217 = vmatpush1.bf16.msra.mxu0 0
        %1218 = vmatprep.subr.bf16.mxu0 0
        %1219 = vmatpush1.bf16.msra.mxu0 0
        %1220 = vmatprep.subr.bf16.mxu0 0
        %1221 = vmatpush1.bf16.msra.mxu0 0
        %1222 = vmatprep.subr.bf16.mxu0 0
        %1223 = vmatpush1.bf16.msra.mxu0 0
        %1224 = vmatprep.subr.bf16.mxu0 0
        %1225 = vmatpush1.bf16.msra.mxu0 0
        %1226 = vmatprep.subr.bf16.mxu0 0
        %1227 = vmatpush1.bf16.msra.mxu0 0
        %1228 = vmatprep.subr.bf16.mxu0 0
        %1229 = vmatpush1.bf16.msra.mxu0 0
        %1230 = vmatprep.subr.bf16.mxu0 0
        %1231 = vmatpush1.bf16.msra.mxu0 0
        %1232 = vmatprep.subr.bf16.mxu0 0
        %1233 = vmatpush1.bf16.msra.mxu0 0
        %1234 = vmatprep.subr.bf16.mxu0 0
        %1235 = vmatpush1.bf16.msra.mxu0 0
        %1236 = vmatprep.subr.bf16.mxu0 0
        %1237 = vmatpush1.bf16.msra.mxu0 0
        %1238 = vmatprep.subr.bf16.mxu0 0
        %1239 = vmatpush1.bf16.msra.mxu0 0
        %1240 = vmatprep.subr.bf16.mxu0 0
        %1241 = vmatpush1.bf16.msra.mxu0 0
        %1242 = vmatprep.subr.bf16.mxu0 0
        %1243 = vmatpush1.bf16.msra.mxu0 0
        %1244 = vmatprep.mubr.bf16.mxu0 0
        %1245 = vmatmul.mubr.bf16.gmra.mrb[0].mxu0 %v1207
        %v1246 = vpop.f32.mrb[0].mxu0
        %v1247 = vadd.f32 0.0, %v1246
        %v1248 = vpop.f32.mrb[0].mxu0
        %v1249 = vpop.f32.mrb[0].mxu0
        %v1250 = vpop.f32.mrb[0].mxu0
        %1251 = vdwg.mxu0
        %1252 = vrot.lane.b32.xlu0 %v857, 56
        %v1253 = vpop.permute.xlu0 %1252
        %v1255 = vsel %vm861, %v1203, 0
        %v1258 = vsel %vm986, %v1253, 0
        %1260 = vmatprep.subr.bf16.mxu0 0
        %1261 = vmatpush1.bf16.msra.mxu0 %v1258
        %1262 = vmatprep.subr.bf16.mxu0 0
        %1263 = vmatpush1.bf16.msra.mxu0 0
        %1264 = vmatprep.subr.bf16.mxu0 0
        %1265 = vmatpush1.bf16.msra.mxu0 0
        %1266 = vmatprep.subr.bf16.mxu0 0
        %1267 = vmatpush1.bf16.msra.mxu0 0
        %1268 = vmatprep.subr.bf16.mxu0 0
        %1269 = vmatpush1.bf16.msra.mxu0 0
        %1270 = vmatprep.subr.bf16.mxu0 0
        %1271 = vmatpush1.bf16.msra.mxu0 0
        %1272 = vmatprep.subr.bf16.mxu0 0
        %1273 = vmatpush1.bf16.msra.mxu0 0
        %1274 = vmatprep.subr.bf16.mxu0 0
        %1275 = vmatpush1.bf16.msra.mxu0 0
        %1276 = vmatprep.subr.bf16.mxu0 0
        %1277 = vmatpush1.bf16.msra.mxu0 0
        %1278 = vmatprep.subr.bf16.mxu0 0
        %1279 = vmatpush1.bf16.msra.mxu0 0
        %1280 = vmatprep.subr.bf16.mxu0 0
        %1281 = vmatpush1.bf16.msra.mxu0 0
        %1282 = vmatprep.subr.bf16.mxu0 0
        %1283 = vmatpush1.bf16.msra.mxu0 0
        %1284 = vmatprep.subr.bf16.mxu0 0
        %1285 = vmatpush1.bf16.msra.mxu0 0
        %1286 = vmatprep.subr.bf16.mxu0 0
        %1287 = vmatpush1.bf16.msra.mxu0 0
        %1288 = vmatprep.subr.bf16.mxu0 0
        %1289 = vmatpush1.bf16.msra.mxu0 0
        %1290 = vmatprep.subr.bf16.mxu0 0
        %1291 = vmatpush1.bf16.msra.mxu0 0
        %1292 = vmatprep.mubr.bf16.mxu0 0
        %1293 = vmatmul.mubr.bf16.gmra.mrb[0].mxu0 %v1255
        %v1294 = vpop.f32.mrb[0].mxu0
        %v1295 = vadd.f32 0.0, %v1294
        %v1296 = vpop.f32.mrb[0].mxu0
        %v1297 = vpop.f32.mrb[0].mxu0
        %v1298 = vpop.f32.mrb[0].mxu0
        %1299 = vdwg.mxu0
        %1302 = vrot.lane.b32.xlu0 %v1247, 8
        %v1303 = vpop.permute.xlu0 %1302
        %1304 = vrot.lane.b32.xlu0 %v1295, 8
        %v1305 = vpop.permute.xlu0 %1304
        %vm1308 = vcmask 130112
        %1309 = vst.msk [vmem:[#allocation2] sm:$0xff] %vm1308, %v1303
        %1310 = vst.msk [vmem:[#allocation2 + $0x8] sm:$0xff] %vm1308, %v1305
        %1311 = vrot.lane.b32.xlu0 %v856, 112
        %v1312 = vpop.permute.xlu0 %1311
        %1313 = vrot.lane.b32.xlu0 %v856, 80
        %v1314 = vpop.permute.xlu0 %1313
        %v1316 = vsel %vm861, %v1312, 0
        %v1319 = vsel %vm861, %v1314, 0
        %1321 = vmatprep.subr.bf16.mxu0 0
        %1322 = vmatpush1.bf16.xpose.msra.mxu0 %v1319
        %1323 = vmatprep.subr.bf16.mxu0 0
        %1324 = vmatpush1.bf16.xpose.msra.mxu0 0
        %1325 = vmatprep.subr.bf16.mxu0 0
        %1326 = vmatpush1.bf16.xpose.msra.mxu0 0
        %1327 = vmatprep.subr.bf16.mxu0 0
        %1328 = vmatpush1.bf16.xpose.msra.mxu0 0
        %1329 = vmatprep.subr.bf16.mxu0 0
        %1330 = vmatpush1.bf16.xpose.msra.mxu0 0
        %1331 = vmatprep.subr.bf16.mxu0 0
        %1332 = vmatpush1.bf16.xpose.msra.mxu0 0
        %1333 = vmatprep.subr.bf16.mxu0 0
        %1334 = vmatpush1.bf16.xpose.msra.mxu0 0
        %1335 = vmatprep.subr.bf16.mxu0 0
        %1336 = vmatpush1.bf16.xpose.msra.mxu0 0
        %1337 = vmatprep.subr.bf16.mxu0 0
        %1338 = vmatpush1.bf16.xpose.msra.mxu0 0
        %1339 = vmatprep.subr.bf16.mxu0 0
        %1340 = vmatpush1.bf16.xpose.msra.mxu0 0
        %1341 = vmatprep.subr.bf16.mxu0 0
        %1342 = vmatpush1.bf16.xpose.msra.mxu0 0
        %1343 = vmatprep.subr.bf16.mxu0 0
        %1344 = vmatpush1.bf16.xpose.msra.mxu0 0
        %1345 = vmatprep.subr.bf16.mxu0 0
        %1346 = vmatpush1.bf16.xpose.msra.mxu0 0
        %1347 = vmatprep.subr.bf16.mxu0 0
        %1348 = vmatpush1.bf16.xpose.msra.mxu0 0
        %1349 = vmatprep.subr.bf16.mxu0 0
        %1350 = vmatpush1.bf16.xpose.msra.mxu0 0
        %1351 = vmatprep.subr.bf16.mxu0 0
        %1352 = vmatpush1.bf16.xpose.msra.mxu0 0
        %1353 = vmatprep.mubr.bf16.mxu0 0
        %1354 = vmatmul.mubr.bf16.gmra.mrb[0].mxu0 %v1316
        %v1355 = vpop.f32.mrb[0].mxu0
        %v1356 = vadd.f32 %v780, %v1355
        %v1357 = vpop.f32.mrb[0].mxu0
        %v1358 = vpop.f32.mrb[0].mxu0
        %v1359 = vpop.f32.mrb[0].mxu0
        %1360 = vdwg.mxu0
        %1361 = vrot.lane.b32.xlu0 %v857, 112
        %v1362 = vpop.permute.xlu0 %1361
        %1363 = vrot.lane.b32.xlu0 %v857, 80
        %v1364 = vpop.permute.xlu0 %1363
        %v1366 = vsel %vm861, %v1362, 0
        %v1369 = vsel %vm861, %v1364, 0
        %1371 = vmatprep.subr.bf16.mxu0 0
        %1372 = vmatpush1.bf16.xpose.msra.mxu0 %v1369
        %1373 = vmatprep.subr.bf16.mxu0 0
        %1374 = vmatpush1.bf16.xpose.msra.mxu0 0
        %1375 = vmatprep.subr.bf16.mxu0 0
        %1376 = vmatpush1.bf16.xpose.msra.mxu0 0
        %1377 = vmatprep.subr.bf16.mxu0 0
        %1378 = vmatpush1.bf16.xpose.msra.mxu0 0
        %1379 = vmatprep.subr.bf16.mxu0 0
        %1380 = vmatpush1.bf16.xpose.msra.mxu0 0
        %1381 = vmatprep.subr.bf16.mxu0 0
        %1382 = vmatpush1.bf16.xpose.msra.mxu0 0
        %1383 = vmatprep.subr.bf16.mxu0 0
        %1384 = vmatpush1.bf16.xpose.msra.mxu0 0
        %1385 = vmatprep.subr.bf16.mxu0 0
        %1386 = vmatpush1.bf16.xpose.msra.mxu0 0
        %1387 = vmatprep.subr.bf16.mxu0 0
        %1388 = vmatpush1.bf16.xpose.msra.mxu0 0
        %1389 = vmatprep.subr.bf16.mxu0 0
        %1390 = vmatpush1.bf16.xpose.msra.mxu0 0
        %1391 = vmatprep.subr.bf16.mxu0 0
        %1392 = vmatpush1.bf16.xpose.msra.mxu0 0
        %1393 = vmatprep.subr.bf16.mxu0 0
        %1394 = vmatpush1.bf16.xpose.msra.mxu0 0
        %1395 = vmatprep.subr.bf16.mxu0 0
        %1396 = vmatpush1.bf16.xpose.msra.mxu0 0
        %1397 = vmatprep.subr.bf16.mxu0 0
        %1398 = vmatpush1.bf16.xpose.msra.mxu0 0
        %1399 = vmatprep.subr.bf16.mxu0 0
        %1400 = vmatpush1.bf16.xpose.msra.mxu0 0
        %1401 = vmatprep.subr.bf16.mxu0 0
        %1402 = vmatpush1.bf16.xpose.msra.mxu0 0
        %1403 = vmatprep.mubr.bf16.mxu0 0
        %1404 = vmatmul.mubr.bf16.gmra.mrb[0].mxu0 %v1366
        %v1405 = vpop.f32.mrb[0].mxu0
        %v1406 = vadd.f32 %v784, %v1405
        %v1407 = vpop.f32.mrb[0].mxu0
        %v1408 = vpop.f32.mrb[0].mxu0
        %v1409 = vpop.f32.mrb[0].mxu0
        %1410 = vdwg.mxu0
        %v1411 = vsel %vm861, %v1356, -inf
        %1412 = vmax.xlane.f32.xlu0 %v1411
        %v1413 = vpop.xlane.xlu0 %1412
        %v1414 = vsel %vm861, %v1406, -inf
        %1415 = vmax.xlane.f32.xlu0 %v1414
        %v1416 = vpop.xlane.xlu0 %1415
        %v1417 = vsub.f32 %v1356, %v1413
        %v1418 = vsub.f32 %v1406, %v1416
        %v1419 = vmul.f32 %v1417, 1.442695
        %v1420 = vpow.pop %v1419
        %v1421 = vmul.f32 %v1418, 1.442695
        %v1422 = vpow.pop %v1421
        %v1423 = vsel %vm861, %v1420, 0.0
        %1424 = vadd.xlane.f32.xlu0 %v1423
        %v1425 = vpop.xlane.xlu0 %1424
        %v1426 = vsel %vm861, %v1422, 0.0
        %1427 = vadd.xlane.f32.xlu0 %v1426
        %v1428 = vpop.xlane.xlu0 %1427
        %v1429 = vrcp.pop %v1425
        %v1430 = vrcp.pop %v1428
        %v1431 = vmul.f32 %v1420, %v1429
        %v1432 = vmul.f32 %v1422, %v1430
        %v1433 = vpack.c.bf16 %v1431, %v1431
        %v1434 = vpack.c.bf16 %v1432, %v1432
        %1435 = vrot.lane.b32.xlu0 %v856, 48
        %v1436 = vpop.permute.xlu0 %1435
        %v1438 = vsel %vm861, %v1433, 0
        %v1441 = vsel %vm986, %v1436, 0
        %1443 = vmatprep.subr.bf16.mxu0 0
        %1444 = vmatpush1.bf16.msra.mxu0 %v1441
        %1445 = vmatprep.subr.bf16.mxu0 0
        %1446 = vmatpush1.bf16.msra.mxu0 0
        %1447 = vmatprep.subr.bf16.mxu0 0
        %1448 = vmatpush1.bf16.msra.mxu0 0
        %1449 = vmatprep.subr.bf16.mxu0 0
        %1450 = vmatpush1.bf16.msra.mxu0 0
        %1451 = vmatprep.subr.bf16.mxu0 0
        %1452 = vmatpush1.bf16.msra.mxu0 0
        %1453 = vmatprep.subr.bf16.mxu0 0
        %1454 = vmatpush1.bf16.msra.mxu0 0
        %1455 = vmatprep.subr.bf16.mxu0 0
        %1456 = vmatpush1.bf16.msra.mxu0 0
        %1457 = vmatprep.subr.bf16.mxu0 0
        %1458 = vmatpush1.bf16.msra.mxu0 0
        %1459 = vmatprep.subr.bf16.mxu0 0
        %1460 = vmatpush1.bf16.msra.mxu0 0
        %1461 = vmatprep.subr.bf16.mxu0 0
        %1462 = vmatpush1.bf16.msra.mxu0 0
        %1463 = vmatprep.subr.bf16.mxu0 0
        %1464 = vmatpush1.bf16.msra.mxu0 0
        %1465 = vmatprep.subr.bf16.mxu0 0
        %1466 = vmatpush1.bf16.msra.mxu0 0
        %1467 = vmatprep.subr.bf16.mxu0 0
        %1468 = vmatpush1.bf16.msra.mxu0 0
        %1469 = vmatprep.subr.bf16.mxu0 0
        %1470 = vmatpush1.bf16.msra.mxu0 0
        %1471 = vmatprep.subr.bf16.mxu0 0
        %1472 = vmatpush1.bf16.msra.mxu0 0
        %1473 = vmatprep.subr.bf16.mxu0 0
        %1474 = vmatpush1.bf16.msra.mxu0 0
        %1475 = vmatprep.mubr.bf16.mxu0 0
        %1476 = vmatmul.mubr.bf16.gmra.mrb[0].mxu0 %v1438
        %v1477 = vpop.f32.mrb[0].mxu0
        %v1478 = vadd.f32 0.0, %v1477
        %v1479 = vpop.f32.mrb[0].mxu0
        %v1480 = vpop.f32.mrb[0].mxu0
        %v1481 = vpop.f32.mrb[0].mxu0
        %1482 = vdwg.mxu0
        %1483 = vrot.lane.b32.xlu0 %v857, 48
        %v1484 = vpop.permute.xlu0 %1483
        %v1486 = vsel %vm861, %v1434, 0
        %v1489 = vsel %vm986, %v1484, 0
        %1491 = vmatprep.subr.bf16.mxu0 0
        %1492 = vmatpush1.bf16.msra.mxu0 %v1489
        %1493 = vmatprep.subr.bf16.mxu0 0
        %1494 = vmatpush1.bf16.msra.mxu0 0
        %1495 = vmatprep.subr.bf16.mxu0 0
        %1496 = vmatpush1.bf16.msra.mxu0 0
        %1497 = vmatprep.subr.bf16.mxu0 0
        %1498 = vmatpush1.bf16.msra.mxu0 0
        %1499 = vmatprep.subr.bf16.mxu0 0
        %1500 = vmatpush1.bf16.msra.mxu0 0
        %1501 = vmatprep.subr.bf16.mxu0 0
        %1502 = vmatpush1.bf16.msra.mxu0 0
        %1503 = vmatprep.subr.bf16.mxu0 0
        %1504 = vmatpush1.bf16.msra.mxu0 0
        %1505 = vmatprep.subr.bf16.mxu0 0
        %1506 = vmatpush1.bf16.msra.mxu0 0
        %1507 = vmatprep.subr.bf16.mxu0 0
        %1508 = vmatpush1.bf16.msra.mxu0 0
        %1509 = vmatprep.subr.bf16.mxu0 0
        %1510 = vmatpush1.bf16.msra.mxu0 0
        %1511 = vmatprep.subr.bf16.mxu0 0
        %1512 = vmatpush1.bf16.msra.mxu0 0
        %1513 = vmatprep.subr.bf16.mxu0 0
        %1514 = vmatpush1.bf16.msra.mxu0 0
        %1515 = vmatprep.subr.bf16.mxu0 0
        %1516 = vmatpush1.bf16.msra.mxu0 0
        %1517 = vmatprep.subr.bf16.mxu0 0
        %1518 = vmatpush1.bf16.msra.mxu0 0
        %1519 = vmatprep.subr.bf16.mxu0 0
        %1520 = vmatpush1.bf16.msra.mxu0 0
        %1521 = vmatprep.subr.bf16.mxu0 0
        %1522 = vmatpush1.bf16.msra.mxu0 0
        %1523 = vmatprep.mubr.bf16.mxu0 0
        %1524 = vmatmul.mubr.bf16.gmra.mrb[0].mxu0 %v1486
        %v1525 = vpop.f32.mrb[0].mxu0
        %v1526 = vadd.f32 0.0, %v1525
        %v1527 = vpop.f32.mrb[0].mxu0
        %v1528 = vpop.f32.mrb[0].mxu0
        %v1529 = vpop.f32.mrb[0].mxu0
        %1530 = vdwg.mxu0
        %1533 = vrot.lane.b32.xlu0 %v1478, 16
        %v1534 = vpop.permute.xlu0 %1533
        %1535 = vrot.lane.b32.xlu0 %v1526, 16
        %v1536 = vpop.permute.xlu0 %1535
        %vm1539 = vcmask 195712
        %1540 = vst.msk [vmem:[#allocation2] sm:$0xff] %vm1539, %v1534
        %1541 = vst.msk [vmem:[#allocation2 + $0x8] sm:$0xff] %vm1539, %v1536
        %1542 = vrot.lane.b32.xlu0 %v856, 104
        %v1543 = vpop.permute.xlu0 %1542
        %1544 = vrot.lane.b32.xlu0 %v856, 72
        %v1545 = vpop.permute.xlu0 %1544
        %v1547 = vsel %vm861, %v1543, 0
        %v1550 = vsel %vm861, %v1545, 0
        %1552 = vmatprep.subr.bf16.mxu0 0
        %1553 = vmatpush1.bf16.xpose.msra.mxu0 %v1550
        %1554 = vmatprep.subr.bf16.mxu0 0
        %1555 = vmatpush1.bf16.xpose.msra.mxu0 0
        %1556 = vmatprep.subr.bf16.mxu0 0
        %1557 = vmatpush1.bf16.xpose.msra.mxu0 0
        %1558 = vmatprep.subr.bf16.mxu0 0
        %1559 = vmatpush1.bf16.xpose.msra.mxu0 0
        %1560 = vmatprep.subr.bf16.mxu0 0
        %1561 = vmatpush1.bf16.xpose.msra.mxu0 0
        %1562 = vmatprep.subr.bf16.mxu0 0
        %1563 = vmatpush1.bf16.xpose.msra.mxu0 0
        %1564 = vmatprep.subr.bf16.mxu0 0
        %1565 = vmatpush1.bf16.xpose.msra.mxu0 0
        %1566 = vmatprep.subr.bf16.mxu0 0
        %1567 = vmatpush1.bf16.xpose.msra.mxu0 0
        %1568 = vmatprep.subr.bf16.mxu0 0
        %1569 = vmatpush1.bf16.xpose.msra.mxu0 0
        %1570 = vmatprep.subr.bf16.mxu0 0
        %1571 = vmatpush1.bf16.xpose.msra.mxu0 0
        %1572 = vmatprep.subr.bf16.mxu0 0
        %1573 = vmatpush1.bf16.xpose.msra.mxu0 0
        %1574 = vmatprep.subr.bf16.mxu0 0
        %1575 = vmatpush1.bf16.xpose.msra.mxu0 0
        %1576 = vmatprep.subr.bf16.mxu0 0
        %1577 = vmatpush1.bf16.xpose.msra.mxu0 0
        %1578 = vmatprep.subr.bf16.mxu0 0
        %1579 = vmatpush1.bf16.xpose.msra.mxu0 0
        %1580 = vmatprep.subr.bf16.mxu0 0
        %1581 = vmatpush1.bf16.xpose.msra.mxu0 0
        %1582 = vmatprep.subr.bf16.mxu0 0
        %1583 = vmatpush1.bf16.xpose.msra.mxu0 0
        %1584 = vmatprep.mubr.bf16.mxu0 0
        %1585 = vmatmul.mubr.bf16.gmra.mrb[0].mxu0 %v1547
        %v1586 = vpop.f32.mrb[0].mxu0
        %v1587 = vadd.f32 %v780, %v1586
        %v1588 = vpop.f32.mrb[0].mxu0
        %v1589 = vpop.f32.mrb[0].mxu0
        %v1590 = vpop.f32.mrb[0].mxu0
        %1591 = vdwg.mxu0
        %1592 = vrot.lane.b32.xlu0 %v857, 104
        %v1593 = vpop.permute.xlu0 %1592
        %1594 = vrot.lane.b32.xlu0 %v857, 72
        %v1595 = vpop.permute.xlu0 %1594
        %v1597 = vsel %vm861, %v1593, 0
        %v1600 = vsel %vm861, %v1595, 0
        %1602 = vmatprep.subr.bf16.mxu0 0
        %1603 = vmatpush1.bf16.xpose.msra.mxu0 %v1600
        %1604 = vmatprep.subr.bf16.mxu0 0
        %1605 = vmatpush1.bf16.xpose.msra.mxu0 0
        %1606 = vmatprep.subr.bf16.mxu0 0
        %1607 = vmatpush1.bf16.xpose.msra.mxu0 0
        %1608 = vmatprep.subr.bf16.mxu0 0
        %1609 = vmatpush1.bf16.xpose.msra.mxu0 0
        %1610 = vmatprep.subr.bf16.mxu0 0
        %1611 = vmatpush1.bf16.xpose.msra.mxu0 0
        %1612 = vmatprep.subr.bf16.mxu0 0
        %1613 = vmatpush1.bf16.xpose.msra.mxu0 0
        %1614 = vmatprep.subr.bf16.mxu0 0
        %1615 = vmatpush1.bf16.xpose.msra.mxu0 0
        %1616 = vmatprep.subr.bf16.mxu0 0
        %1617 = vmatpush1.bf16.xpose.msra.mxu0 0
        %1618 = vmatprep.subr.bf16.mxu0 0
        %1619 = vmatpush1.bf16.xpose.msra.mxu0 0
        %1620 = vmatprep.subr.bf16.mxu0 0
        %1621 = vmatpush1.bf16.xpose.msra.mxu0 0
        %1622 = vmatprep.subr.bf16.mxu0 0
        %1623 = vmatpush1.bf16.xpose.msra.mxu0 0
        %1624 = vmatprep.subr.bf16.mxu0 0
        %1625 = vmatpush1.bf16.xpose.msra.mxu0 0
        %1626 = vmatprep.subr.bf16.mxu0 0
        %1627 = vmatpush1.bf16.xpose.msra.mxu0 0
        %1628 = vmatprep.subr.bf16.mxu0 0
        %1629 = vmatpush1.bf16.xpose.msra.mxu0 0
        %1630 = vmatprep.subr.bf16.mxu0 0
        %1631 = vmatpush1.bf16.xpose.msra.mxu0 0
        %1632 = vmatprep.subr.bf16.mxu0 0
        %1633 = vmatpush1.bf16.xpose.msra.mxu0 0
        %1634 = vmatprep.mubr.bf16.mxu0 0
        %1635 = vmatmul.mubr.bf16.gmra.mrb[0].mxu0 %v1597
        %v1636 = vpop.f32.mrb[0].mxu0
        %v1637 = vadd.f32 %v784, %v1636
        %v1638 = vpop.f32.mrb[0].mxu0
        %v1639 = vpop.f32.mrb[0].mxu0
        %v1640 = vpop.f32.mrb[0].mxu0
        %1641 = vdwg.mxu0
        %v1642 = vsel %vm861, %v1587, -inf
        %1643 = vmax.xlane.f32.xlu0 %v1642
        %v1644 = vpop.xlane.xlu0 %1643
        %v1645 = vsel %vm861, %v1637, -inf
        %1646 = vmax.xlane.f32.xlu0 %v1645
        %v1647 = vpop.xlane.xlu0 %1646
        %v1648 = vsub.f32 %v1587, %v1644
        %v1649 = vsub.f32 %v1637, %v1647
        %v1650 = vmul.f32 %v1648, 1.442695
        %v1651 = vpow.pop %v1650
        %v1652 = vmul.f32 %v1649, 1.442695
        %v1653 = vpow.pop %v1652
        %v1654 = vsel %vm861, %v1651, 0.0
        %1655 = vadd.xlane.f32.xlu0 %v1654
        %v1656 = vpop.xlane.xlu0 %1655
        %v1657 = vsel %vm861, %v1653, 0.0
        %1658 = vadd.xlane.f32.xlu0 %v1657
        %v1659 = vpop.xlane.xlu0 %1658
        %v1660 = vrcp.pop %v1656
        %v1661 = vrcp.pop %v1659
        %v1662 = vmul.f32 %v1651, %v1660
        %v1663 = vmul.f32 %v1653, %v1661
        %v1664 = vpack.c.bf16 %v1662, %v1662
        %v1665 = vpack.c.bf16 %v1663, %v1663
        %1666 = vrot.lane.b32.xlu0 %v856, 40
        %v1667 = vpop.permute.xlu0 %1666
        %v1669 = vsel %vm861, %v1664, 0
        %v1672 = vsel %vm986, %v1667, 0
        %1674 = vmatprep.subr.bf16.mxu0 0
        %1675 = vmatpush1.bf16.msra.mxu0 %v1672
        %1676 = vmatprep.subr.bf16.mxu0 0
        %1677 = vmatpush1.bf16.msra.mxu0 0
        %1678 = vmatprep.subr.bf16.mxu0 0
        %1679 = vmatpush1.bf16.msra.mxu0 0
        %1680 = vmatprep.subr.bf16.mxu0 0
        %1681 = vmatpush1.bf16.msra.mxu0 0
        %1682 = vmatprep.subr.bf16.mxu0 0
        %1683 = vmatpush1.bf16.msra.mxu0 0
        %1684 = vmatprep.subr.bf16.mxu0 0
        %1685 = vmatpush1.bf16.msra.mxu0 0
        %1686 = vmatprep.subr.bf16.mxu0 0
        %1687 = vmatpush1.bf16.msra.mxu0 0
        %1688 = vmatprep.subr.bf16.mxu0 0
        %1689 = vmatpush1.bf16.msra.mxu0 0
        %1690 = vmatprep.subr.bf16.mxu0 0
        %1691 = vmatpush1.bf16.msra.mxu0 0
        %1692 = vmatprep.subr.bf16.mxu0 0
        %1693 = vmatpush1.bf16.msra.mxu0 0
        %1694 = vmatprep.subr.bf16.mxu0 0
        %1695 = vmatpush1.bf16.msra.mxu0 0
        %1696 = vmatprep.subr.bf16.mxu0 0
        %1697 = vmatpush1.bf16.msra.mxu0 0
        %1698 = vmatprep.subr.bf16.mxu0 0
        %1699 = vmatpush1.bf16.msra.mxu0 0
        %1700 = vmatprep.subr.bf16.mxu0 0
        %1701 = vmatpush1.bf16.msra.mxu0 0
        %1702 = vmatprep.subr.bf16.mxu0 0
        %1703 = vmatpush1.bf16.msra.mxu0 0
        %1704 = vmatprep.subr.bf16.mxu0 0
        %1705 = vmatpush1.bf16.msra.mxu0 0
        %1706 = vmatprep.mubr.bf16.mxu0 0
        %1707 = vmatmul.mubr.bf16.gmra.mrb[0].mxu0 %v1669
        %v1708 = vpop.f32.mrb[0].mxu0
        %v1709 = vadd.f32 0.0, %v1708
        %v1710 = vpop.f32.mrb[0].mxu0
        %v1711 = vpop.f32.mrb[0].mxu0
        %v1712 = vpop.f32.mrb[0].mxu0
        %1713 = vdwg.mxu0
        %1714 = vrot.lane.b32.xlu0 %v857, 40
        %v1715 = vpop.permute.xlu0 %1714
        %v1717 = vsel %vm861, %v1665, 0
        %v1720 = vsel %vm986, %v1715, 0
        %1722 = vmatprep.subr.bf16.mxu0 0
        %1723 = vmatpush1.bf16.msra.mxu0 %v1720
        %1724 = vmatprep.subr.bf16.mxu0 0
        %1725 = vmatpush1.bf16.msra.mxu0 0
        %1726 = vmatprep.subr.bf16.mxu0 0
        %1727 = vmatpush1.bf16.msra.mxu0 0
        %1728 = vmatprep.subr.bf16.mxu0 0
        %1729 = vmatpush1.bf16.msra.mxu0 0
        %1730 = vmatprep.subr.bf16.mxu0 0
        %1731 = vmatpush1.bf16.msra.mxu0 0
        %1732 = vmatprep.subr.bf16.mxu0 0
        %1733 = vmatpush1.bf16.msra.mxu0 0
        %1734 = vmatprep.subr.bf16.mxu0 0
        %1735 = vmatpush1.bf16.msra.mxu0 0
        %1736 = vmatprep.subr.bf16.mxu0 0
        %1737 = vmatpush1.bf16.msra.mxu0 0
        %1738 = vmatprep.subr.bf16.mxu0 0
        %1739 = vmatpush1.bf16.msra.mxu0 0
        %1740 = vmatprep.subr.bf16.mxu0 0
        %1741 = vmatpush1.bf16.msra.mxu0 0
        %1742 = vmatprep.subr.bf16.mxu0 0
        %1743 = vmatpush1.bf16.msra.mxu0 0
        %1744 = vmatprep.subr.bf16.mxu0 0
        %1745 = vmatpush1.bf16.msra.mxu0 0
        %1746 = vmatprep.subr.bf16.mxu0 0
        %1747 = vmatpush1.bf16.msra.mxu0 0
        %1748 = vmatprep.subr.bf16.mxu0 0
        %1749 = vmatpush1.bf16.msra.mxu0 0
        %1750 = vmatprep.subr.bf16.mxu0 0
        %1751 = vmatpush1.bf16.msra.mxu0 0
        %1752 = vmatprep.subr.bf16.mxu0 0
        %1753 = vmatpush1.bf16.msra.mxu0 0
        %1754 = vmatprep.mubr.bf16.mxu0 0
        %1755 = vmatmul.mubr.bf16.gmra.mrb[0].mxu0 %v1717
        %v1756 = vpop.f32.mrb[0].mxu0
        %v1757 = vadd.f32 0.0, %v1756
        %v1758 = vpop.f32.mrb[0].mxu0
        %v1759 = vpop.f32.mrb[0].mxu0
        %v1760 = vpop.f32.mrb[0].mxu0
        %1761 = vdwg.mxu0
        %1764 = vrot.lane.b32.xlu0 %v1709, 24
        %v1765 = vpop.permute.xlu0 %1764
        %1766 = vrot.lane.b32.xlu0 %v1757, 24
        %v1767 = vpop.permute.xlu0 %1766
        %vm1770 = vcmask 261312
        %1771 = vst.msk [vmem:[#allocation2] sm:$0xff] %vm1770, %v1765
        %1772 = vst.msk [vmem:[#allocation2 + $0x8] sm:$0xff] %vm1770, %v1767
        %v1773 = vld [vmem:[#allocation2] sm:$0xff]
        %v1774 = vld [vmem:[#allocation2 + $0x8] sm:$0xff]
        %v1775 = vpack.c.bf16 %v1774, %v1773
        %v1776 = vld [vmem:[%s740] sm:$0xf]
        %v1777 = vld [vmem:[%s740 + $0x4] sm:$0xf]
        %v1778 = vld [vmem:[%s740 + $0x8] sm:$0xf]
        %v1779 = vld [vmem:[%s740 + $0xc] sm:$0xf]
        %v1780 = vld [vmem:[%s611] sm:$0x1]
        %v1782 = vlaneseq
        %v1783 = vshrl.u32 %v1782, 7
        %v1784 = vsub.s32 0, %v1783
        %v1785 = vrot.slane %v1780, %v1784
        %v1791 = vunpack.c.l.b16 %v1776
        %v1792 = vunpack.c.l.b16 %v1777
        %v1793 = vunpack.c.l.b16 %v1778
        %v1794 = vunpack.c.l.b16 %v1779
        %v1795 = vpack.c.b16 %v1792, %v1791
        %v1796 = vpack.c.b16 %v1794, %v1793
        %v1800 = vsel %vm811, %v1775, 0
        %1802 = vmatprep.subr.bf16.mxu0 0
        %1803 = vmatpush1.bf16.msra.mxu0 %v1795
        %1804 = vmatprep.subr.bf16.mxu0 0
        %1805 = vmatpush1.bf16.msra.mxu0 %v1796
        %1806 = vmatprep.subr.bf16.mxu0 0
        %1807 = vmatpush1.bf16.msra.mxu0 0
        %1808 = vmatprep.subr.bf16.mxu0 0
        %1809 = vmatpush1.bf16.msra.mxu0 0
        %1810 = vmatprep.subr.bf16.mxu0 0
        %1811 = vmatpush1.bf16.msra.mxu0 0
        %1812 = vmatprep.subr.bf16.mxu0 0
        %1813 = vmatpush1.bf16.msra.mxu0 0
        %1814 = vmatprep.subr.bf16.mxu0 0
        %1815 = vmatpush1.bf16.msra.mxu0 0
        %1816 = vmatprep.subr.bf16.mxu0 0
        %1817 = vmatpush1.bf16.msra.mxu0 0
        %1818 = vmatprep.subr.bf16.mxu0 0
        %1819 = vmatpush1.bf16.msra.mxu0 0
        %1820 = vmatprep.subr.bf16.mxu0 0
        %1821 = vmatpush1.bf16.msra.mxu0 0
        %1822 = vmatprep.subr.bf16.mxu0 0
        %1823 = vmatpush1.bf16.msra.mxu0 0
        %1824 = vmatprep.subr.bf16.mxu0 0
        %1825 = vmatpush1.bf16.msra.mxu0 0
        %1826 = vmatprep.subr.bf16.mxu0 0
        %1827 = vmatpush1.bf16.msra.mxu0 0
        %1828 = vmatprep.subr.bf16.mxu0 0
        %1829 = vmatpush1.bf16.msra.mxu0 0
        %1830 = vmatprep.subr.bf16.mxu0 0
        %1831 = vmatpush1.bf16.msra.mxu0 0
        %1832 = vmatprep.subr.bf16.mxu0 0
        %1833 = vmatpush1.bf16.msra.mxu0 0
        %1834 = vmatprep.mubr.bf16.mxu0 0
        %1835 = vmatmul.mubr.bf16.gmra.mrb[0].mxu0 %v1800
        %v1836 = vpop.f32.mrb[0].mxu0
        %v1837 = vadd.f32 %v1785, %v1836
        %v1838 = vpop.f32.mrb[0].mxu0
        %v1839 = vpop.f32.mrb[0].mxu0
        %v1840 = vadd.f32 %v1785, %v1839
        %v1841 = vpop.f32.mrb[0].mxu0
        %1842 = vdwg.mxu0
        %v1843 = vadd.f32 %v771, %v1837
        %v1844 = vadd.f32 %v772, %v1840
        %v1845 = vld [vmem:[%s619] sm:$0x1]
        %v1846 = vld [vmem:[%s627] sm:$0x1]
        %v1847 = vsel %vm811, %v1843, 0.0
        %1848 = vadd.xlane.f32.xlu0 %v1847
        %v1849 = vpop.xlane.xlu0 %1848
        %v1850 = vsel %vm811, %v1844, 0.0
        %1851 = vadd.xlane.f32.xlu0 %v1850
        %v1852 = vpop.xlane.xlu0 %1851
        %v1853 = vrcp.pop 32.0
        %v1854 = vmul.f32 %v1849, %v1853
        %v1855 = vmul.f32 %v1852, %v1853
        %v1856 = vmul.f32 %v1843, %v1843
        %v1857 = vmul.f32 %v1844, %v1844
        %v1858 = vsel %vm811, %v1856, 0.0
        %1859 = vadd.xlane.f32.xlu0 %v1858
        %v1860 = vpop.xlane.xlu0 %1859
        %v1861 = vsel %vm811, %v1857, 0.0
        %1862 = vadd.xlane.f32.xlu0 %v1861
        %v1863 = vpop.xlane.xlu0 %1862
        %v1864 = vmul.f32 %v1860, %v1853
        %v1865 = vmul.f32 %v1863, %v1853
        %v1866 = vmul.f32 %v1854, %v1854
        %v1867 = vmul.f32 %v1855, %v1855
        %v1868 = vsub.f32 %v1864, %v1866
        %v1869 = vsub.f32 %v1865, %v1867
        %v1870 = vmax.f32 %v1868, 0.0
        %v1871 = vmax.f32 %v1869, 0.0
        %v1872 = vsub.f32 %v1843, %v1854
        %v1873 = vsub.f32 %v1844, %v1855
        %v1874 = vadd.f32 %v1870, 1e-05
        %v1875 = vadd.f32 %v1871, 1e-05
        %v1876 = vrsqrt.pop %v1874
        %v1877 = vrsqrt.pop %v1875
        %v1878 = vmul.f32 %v1872, %v1876
        %v1879 = vmul.f32 %v1873, %v1877
        %v1881 = vlaneseq
        %v1882 = vshrl.u32 %v1881, 7
        %v1883 = vsub.s32 0, %v1882
        %v1884 = vrot.slane %v1845, %v1883
        %v1886 = vmul.f32 %v1878, %v1884
        %v1887 = vmul.f32 %v1879, %v1884
        %v1889 = vlaneseq
        %v1890 = vshrl.u32 %v1889, 7
        %v1891 = vsub.s32 0, %v1890
        %v1892 = vrot.slane %v1846, %v1891
        %v1894 = vadd.f32 %v1886, %v1892
        %v1895 = vadd.f32 %v1887, %v1892
        %v1896 = vpack.c.bf16 %v1895, %v1894
        %v1897 = vld [vmem:[%s745] sm:$0xf]
        %v1898 = vld [vmem:[%s745 + $0x4] sm:$0xf]
        %v1899 = vld [vmem:[%s745 + $0x8] sm:$0xf]
        %v1900 = vld [vmem:[%s745 + $0xc] sm:$0xf]
        %v1901 = vld [vmem:[%s635] sm:$0x1]
        %v1903 = vlaneseq
        %v1904 = vshrl.u32 %v1903, 7
        %v1905 = vsub.s32 0, %v1904
        %v1906 = vrot.slane %v1901, %v1905
        %v1912 = vunpack.c.l.b16 %v1897
        %v1913 = vunpack.c.l.b16 %v1898
        %v1914 = vunpack.c.l.b16 %v1899
        %v1915 = vunpack.c.l.b16 %v1900
        %v1916 = vpack.c.b16 %v1913, %v1912
        %v1917 = vpack.c.b16 %v1915, %v1914
        %v1921 = vsel %vm811, %v1896, 0
        %1923 = vmatprep.subr.bf16.mxu0 0
        %1924 = vmatpush1.bf16.msra.mxu0 %v1916
        %1925 = vmatprep.subr.bf16.mxu0 0
        %1926 = vmatpush1.bf16.msra.mxu0 %v1917
        %1927 = vmatprep.subr.bf16.mxu0 0
        %1928 = vmatpush1.bf16.msra.mxu0 0
        %1929 = vmatprep.subr.bf16.mxu0 0
        %1930 = vmatpush1.bf16.msra.mxu0 0
        %1931 = vmatprep.subr.bf16.mxu0 0
        %1932 = vmatpush1.bf16.msra.mxu0 0
        %1933 = vmatprep.subr.bf16.mxu0 0
        %1934 = vmatpush1.bf16.msra.mxu0 0
        %1935 = vmatprep.subr.bf16.mxu0 0
        %1936 = vmatpush1.bf16.msra.mxu0 0
        %1937 = vmatprep.subr.bf16.mxu0 0
        %1938 = vmatpush1.bf16.msra.mxu0 0
        %1939 = vmatprep.subr.bf16.mxu0 0
        %1940 = vmatpush1.bf16.msra.mxu0 0
        %1941 = vmatprep.subr.bf16.mxu0 0
        %1942 = vmatpush1.bf16.msra.mxu0 0
        %1943 = vmatprep.subr.bf16.mxu0 0
        %1944 = vmatpush1.bf16.msra.mxu0 0
        %1945 = vmatprep.subr.bf16.mxu0 0
        %1946 = vmatpush1.bf16.msra.mxu0 0
        %1947 = vmatprep.subr.bf16.mxu0 0
        %1948 = vmatpush1.bf16.msra.mxu0 0
        %1949 = vmatprep.subr.bf16.mxu0 0
        %1950 = vmatpush1.bf16.msra.mxu0 0
        %1951 = vmatprep.subr.bf16.mxu0 0
        %1952 = vmatpush1.bf16.msra.mxu0 0
        %1953 = vmatprep.subr.bf16.mxu0 0
        %1954 = vmatpush1.bf16.msra.mxu0 0
        %1955 = vmatprep.mubr.bf16.mxu0 0
        %1956 = vmatmul.mubr.bf16.gmra.mrb[0].mxu0 %v1921
        %v1957 = vpop.f32.mrb[0].mxu0
        %v1958 = vadd.f32 %v1906, %v1957
        %v1959 = vpop.f32.mrb[0].mxu0
        %v1960 = vpop.f32.mrb[0].mxu0
        %v1961 = vadd.f32 %v1906, %v1960
        %v1962 = vpop.f32.mrb[0].mxu0
        %1963 = vdwg.mxu0
        %v1964 = vmax.f32 %v1958, 0.0
        %v1965 = vmax.f32 %v1961, 0.0
        %v1966 = vpack.c.bf16 %v1965, %v1964
        %v1967 = vld [vmem:[%s750] sm:$0xf]
        %v1968 = vld [vmem:[%s750 + $0x4] sm:$0xf]
        %v1969 = vld [vmem:[%s750 + $0x8] sm:$0xf]
        %v1970 = vld [vmem:[%s750 + $0xc] sm:$0xf]
        %v1971 = vld [vmem:[%s750 + $0x10] sm:$0xf]
        %v1972 = vld [vmem:[%s750 + $0x14] sm:$0xf]
        %v1973 = vld [vmem:[%s750 + $0x18] sm:$0xf]
        %v1974 = vld [vmem:[%s750 + $0x1c] sm:$0xf]
        %v1983 = vunpack.c.l.b16 %v1967
        %v1984 = vunpack.c.l.b16 %v1968
        %v1985 = vunpack.c.l.b16 %v1969
        %v1986 = vunpack.c.l.b16 %v1970
        %v1987 = vunpack.c.l.b16 %v1971
        %v1988 = vunpack.c.l.b16 %v1972
        %v1989 = vunpack.c.l.b16 %v1973
        %v1990 = vunpack.c.l.b16 %v1974
        %v1991 = vpack.c.b16 %v1984, %v1983
        %v1992 = vpack.c.b16 %v1986, %v1985
        %v1993 = vpack.c.b16 %v1988, %v1987
        %v1994 = vpack.c.b16 %v1990, %v1989
        %vm1999 = vcmask 523264
        %v2001 = vsel %vm1999, %v1966, 0
        %2003 = vmatprep.subr.bf16.mxu0 0
        %2004 = vmatpush1.bf16.msra.mxu0 %v1991
        %2005 = vmatprep.subr.bf16.mxu0 0
        %2006 = vmatpush1.bf16.msra.mxu0 %v1992
        %2007 = vmatprep.subr.bf16.mxu0 0
        %2008 = vmatpush1.bf16.msra.mxu0 %v1993
        %2009 = vmatprep.subr.bf16.mxu0 0
        %2010 = vmatpush1.bf16.msra.mxu0 %v1994
        %2011 = vmatprep.subr.bf16.mxu0 0
        %2012 = vmatpush1.bf16.msra.mxu0 0
        %2013 = vmatprep.subr.bf16.mxu0 0
        %2014 = vmatpush1.bf16.msra.mxu0 0
        %2015 = vmatprep.subr.bf16.mxu0 0
        %2016 = vmatpush1.bf16.msra.mxu0 0
        %2017 = vmatprep.subr.bf16.mxu0 0
        %2018 = vmatpush1.bf16.msra.mxu0 0
        %2019 = vmatprep.subr.bf16.mxu0 0
        %2020 = vmatpush1.bf16.msra.mxu0 0
        %2021 = vmatprep.subr.bf16.mxu0 0
        %2022 = vmatpush1.bf16.msra.mxu0 0
        %2023 = vmatprep.subr.bf16.mxu0 0
        %2024 = vmatpush1.bf16.msra.mxu0 0
        %2025 = vmatprep.subr.bf16.mxu0 0
        %2026 = vmatpush1.bf16.msra.mxu0 0
        %2027 = vmatprep.subr.bf16.mxu0 0
        %2028 = vmatpush1.bf16.msra.mxu0 0
        %2029 = vmatprep.subr.bf16.mxu0 0
        %2030 = vmatpush1.bf16.msra.mxu0 0
        %2031 = vmatprep.subr.bf16.mxu0 0
        %2032 = vmatpush1.bf16.msra.mxu0 0
        %2033 = vmatprep.subr.bf16.mxu0 0
        %2034 = vmatpush1.bf16.msra.mxu0 0
        %2035 = vmatprep.mubr.bf16.mxu0 0
        %2036 = vmatmul.mubr.bf16.gmra.mrb[0].mxu0 %v2001
        %v2037 = vpop.f32.mrb[0].mxu0
        %v2038 = vadd.f32 0.0, %v2037
        %v2039 = vpop.f32.mrb[0].mxu0
        %v2040 = vpop.f32.mrb[0].mxu0
        %v2041 = vadd.f32 0.0, %v2040
        %v2042 = vpop.f32.mrb[0].mxu0
        %2043 = vdwg.mxu0
        %v2044 = vadd.f32 %v1894, %v2038
        %v2045 = vadd.f32 %v1895, %v2041
        %v2046 = vld [vmem:[%s753] sm:$0x1]
        %v2048 = vlaneseq
        %v2049 = vshrl.u32 %v2048, 7
        %v2050 = vsub.s32 0, %v2049
        %v2051 = vrot.slane %v2046, %v2050
        %v2053 = vadd.f32 %v2044, %v2051
        %v2054 = vadd.f32 %v2045, %v2051
        %v2055 = vld [vmem:[%s756] sm:$0x1]
        %v2056 = vld [vmem:[%s759] sm:$0x1]
        %v2057 = vsel %vm811, %v2053, 0.0
        %2058 = vadd.xlane.f32.xlu0 %v2057
        %v2059 = vpop.xlane.xlu0 %2058
        %v2060 = vsel %vm811, %v2054, 0.0
        %2061 = vadd.xlane.f32.xlu0 %v2060
        %v2062 = vpop.xlane.xlu0 %2061
        %v2063 = vmul.f32 %v2059, %v1853
        %v2064 = vmul.f32 %v2062, %v1853
        %v2065 = vmul.f32 %v2053, %v2053
        %v2066 = vmul.f32 %v2054, %v2054
        %v2067 = vsel %vm811, %v2065, 0.0
        %2068 = vadd.xlane.f32.xlu0 %v2067
        %v2069 = vpop.xlane.xlu0 %2068
        %v2070 = vsel %vm811, %v2066, 0.0
        %2071 = vadd.xlane.f32.xlu0 %v2070
        %v2072 = vpop.xlane.xlu0 %2071
        %v2073 = vmul.f32 %v2069, %v1853
        %v2074 = vmul.f32 %v2072, %v1853
        %v2075 = vmul.f32 %v2063, %v2063
        %v2076 = vmul.f32 %v2064, %v2064
        %v2077 = vsub.f32 %v2073, %v2075
        %v2078 = vsub.f32 %v2074, %v2076
        %v2079 = vmax.f32 %v2077, 0.0
        %v2080 = vmax.f32 %v2078, 0.0
        %v2081 = vsub.f32 %v2053, %v2063
        %v2082 = vsub.f32 %v2054, %v2064
        %v2083 = vadd.f32 %v2079, 1e-05
        %v2084 = vadd.f32 %v2080, 1e-05
        %v2085 = vrsqrt.pop %v2083
        %v2086 = vrsqrt.pop %v2084
        %v2087 = vmul.f32 %v2081, %v2085
        %v2088 = vmul.f32 %v2082, %v2086
        %v2090 = vlaneseq
        %v2091 = vshrl.u32 %v2090, 7
        %v2092 = vsub.s32 0, %v2091
        %v2093 = vrot.slane %v2055, %v2092
        %v2095 = vmul.f32 %v2087, %v2093
        %v2096 = vmul.f32 %v2088, %v2093
        %v2098 = vlaneseq
        %v2099 = vshrl.u32 %v2098, 7
        %v2100 = vsub.s32 0, %v2099
        %v2101 = vrot.slane %v2056, %v2100
        %v2103 = vadd.f32 %v2095, %v2101
        %v2104 = vadd.f32 %v2096, %v2101
        %2105 = vst.msk [vmem:[#allocation12] sm:$0xff] %vm811, %v2103
        %2106 = vst.msk [vmem:[#allocation12 + $0x8] sm:$0xff] %vm811, %v2104
        // Predicated region
        $region101: #{tpu_custom_call.1} parent=75 // pred_check
          %p2107 = pneg %p427
        $region102: #{tpu_custom_call.1} parent=75 // pred_check_branch
          %2109 = sbr.rel (%p2107) target = $region104
        $region103: #{tpu_custom_call.1} parent=75 // pred_region
          %s2110 = smul.u32 2, %s37
          %s2112 = ssub.s32 256, 256
          %2113 = vsyncadd [#allocation5], %s2112
          %s2114 = smul.addr %s2110, 128
          %s2115 = scalar_lea.hbm %s14, %s2114
          %s2116 = sshll.u32 [#allocation12], 4
          %s2117 = int_to_ptr.vmem [resolvable:$true] %s2116
          %2122 = dma.vmem_to_hbm [thread:$0]  %s2117, 256, %s2115, [#allocation5], 128, 128, 8
        $region104: #{tpu_custom_call.1} parent=75 // pred_fallthru
          _
        // Predicated region
        $region105: #{tpu_custom_call.1} parent=75 // pred_check
          %p2123 = pneg %p427
        $region106: #{tpu_custom_call.1} parent=75 // pred_check_branch
          %2125 = sbr.rel (%p2123) target = $region108
        $region107: #{tpu_custom_call.1} parent=75 // pred_region
          %2126 = dma.done [#allocation5], 256
        $region108: #{tpu_custom_call.1} parent=75 // pred_fallthru
          _
      $region76: #{tpu_custom_call.1} parent=5 // pred_fallthru
        _
      %p2127 = scmp.le.s32.totalorder 2, %s28
      // Predicated region
      $region109: #{tpu_custom_call.1} parent=5 // pred_check
        %p2128 = pneg %p2127
      $region110: #{tpu_custom_call.1} parent=5 // pred_check_branch
        %2130 = sbr.rel (%p2128) target = $region112
      $region111: #{tpu_custom_call.1} parent=5 // pred_region
        %s2131 = ssub.s32 %s28, 2
      $region112: #{tpu_custom_call.1} parent=5 // pred_fallthru
        _
    $region6: #{tpu_custom_call.1} parent=1 // loop_footer
      %s32 = sadd.s32 1, %s28
    $region7: #{tpu_custom_call.1} parent=1 // loop_footer_branch
      %27 = sbr.rel target = $region3
    $region8: #{tpu_custom_call.1} parent=1 // loop_exit
      _
    %2132 = vsyncpa [#allocation4], 1
    %s2133 = scalar_lea.sflag [#allocation4], 1
    %2134 = vsyncpa %s2133, 1
    %2135 = vsyncpa [#allocation7], 1
    %s2136 = scalar_lea.sflag [#allocation7], 1
    %2137 = vsyncpa %s2136, 1
    %2138 = vsyncpa [#allocation10], 1
    %s2139 = scalar_lea.sflag [#allocation10], 1
    %2140 = vsyncpa %s2139, 1
    %2141 = vsyncpa [#allocation5], 1
    %s2142 = scalar_lea.sflag [#allocation5], 1
    %2143 = vsyncpa %s2142, 1

</llo_original>
